<compile_context>
chip_gen: v7x
topology: tpu7x:2x2x1
jax: 0.10.0
libtpu: 0.0.40
codegen_flags: <defaults>
</compile_context>

<pallas_src>
import jax
import jax.numpy as jnp
from jax.experimental import pallas as pl
from jax.experimental.pallas import tpu as pltpu


# ---------------------------------------------------------------------------
# Kernel
# ---------------------------------------------------------------------------
def _make_kernel(d_in, act_dtype, matmul_dtype):
    def mhpinn_kernel(rt_ref, w1t_ref, b1_ref, w2t_ref, b2_ref, woutt_ref,
                      bfin_ref, out_ref):
        """One lane-dense batch tile of the fused multi-head forward pass.

        rt_ref   : (D_IN, TN)       input tile, batch along lanes (f32)
        w1t_ref  : (H*H1, D_IN)     fused (transposed) first hidden layer (f32)
        b1_ref   : (H*H1, 1)        f32
        w2t_ref  : (H*H1, H*H1)     block-diagonal (transposed) 2nd layer (matmul_dtype)
        b2_ref   : (H*H1, 1)        f32
        woutt_ref: (1, H*H1)        folded (w3 @ we) per head (matmul_dtype)
        bfin_ref : (1, 1)           folded sum_h b3[h]@we[h] + be (f32)
        out_ref  : (1, TN)          lane-dense output row (f32)
        """
        xt = rt_ref[...].astype(jnp.float32)                      # (D_IN, TN)
        w1t = w1t_ref[...]                                        # (HH1, D_IN)

        # Layer 1 on the VPU: the MXU contraction would be >98% zero-padding
        # at K = d_in, and the VALU has slack (tanh saturates the EUP).
        # d_in is static -> trace-time unroll of rank-1 broadcast FMAs.
        z = b1_ref[...] + w1t[:, 0:1] * xt[0:1, :]                # (HH1, TN)
        for k in range(1, d_in):
            z = z + w1t[:, k:k + 1] * xt[k:k + 1, :]
        z = jnp.tanh(z.astype(act_dtype))                         # (HH1, TN)

        # Layer 2: block-diagonal fused matmul on the MXU, f32 accumulation.
        z = jnp.dot(w2t_ref[...], z.astype(matmul_dtype),
                    preferred_element_type=jnp.float32) + b2_ref[...]
        z = jnp.tanh(z.astype(act_dtype))                         # (HH1, TN)

        # Folded output layer (w3 @ we) + end_net bias.
        y = jnp.dot(woutt_ref[...], z.astype(matmul_dtype),
                    preferred_element_type=jnp.float32) + bfin_ref[...]
        out_ref[...] = y.astype(out_ref.dtype)                    # (1, TN)

    return mhpinn_kernel


# ---------------------------------------------------------------------------
# Wrapper-side parameter fusion (exact in real arithmetic)
# ---------------------------------------------------------------------------
def _fuse_params(params, matmul_dtype):
    w1, b1 = params["w1"], params["b1"]
    w2, b2 = params["w2"], params["b2"]
    w3, b3 = params["w3"], params["b3"]
    we, be = params["we"], params["be"]
    f32 = jnp.float32
    H, d_in, h1 = w1.shape

    # First layer, head-concatenated & transposed: row (h*h1 + k) = w1[h][:, k].
    w1t = w1.astype(f32).transpose(0, 2, 1).reshape(H * h1, d_in)     # (H*h1, d_in)
    b1c = b1.astype(f32).reshape(H * h1, 1)

    # Second layer, block-diagonal & transposed (trace-time loop, H is small).
    # TODO(synk): for H*h1 > 256 (v5e: > 128) the dense block-diagonal fusion
    # wastes O((H*h1)^2) MXU FLOPs; group heads into <=256-wide fused blocks
    # or switch to a per-head batched matmul in that regime.
    w2t = jnp.zeros((H * h1, H * h1), f32)
    for h in range(H):
        w2t = w2t.at[h * h1:(h + 1) * h1, h * h1:(h + 1) * h1].set(
            w2[h].astype(f32).T)
    b2c = b2.astype(f32).reshape(H * h1, 1)

    # Fold per-head output layer into the end_net.
    wout = jnp.einsum("hio,hoj->hij", w3.astype(f32), we.astype(f32))  # (H, h1, 1)
    woutt = wout.reshape(H * h1, 1).T                                  # (1, H*h1)
    bfin = (jnp.einsum("ho,hoj->j", b3.astype(f32), we.astype(f32))
            .reshape(1, 1) + be.astype(f32))                           # (1, 1)

    return (w1t, b1c, w2t.astype(matmul_dtype), b2c,
            woutt.astype(matmul_dtype), bfin)


# ---------------------------------------------------------------------------
# Generation-aware knobs
# ---------------------------------------------------------------------------
def _num_tensorcores():
    """TensorCores the 'parallel' grid axis can be sharded across (megacore)."""
    try:
        kind = jax.devices()[0].device_kind.lower()
    except Exception:
        return 1
    if "lite" in kind or "v5e" in kind or "v6" in kind:
        return 1                                   # v5e / v6e: single TC
    if ("v7" in kind or "7x" in kind or "v4" in kind or "v5p" in kind
            or kind.strip().endswith("v5")):
        return 2                                   # v7x / v4 / v5p megacore
    return 1


def _auto_dtypes():
    """(act_dtype, matmul_dtype) tuned per generation; f32 accumulation always."""
    try:
        kind = jax.devices()[0].device_kind.lower()
    except Exception:
        return jnp.float32, jnp.float32
    if "v6" in kind or "v7" in kind or "7x" in kind:
        return jnp.bfloat16, jnp.bfloat16          # bf16 EUP/VPU + bf16 MXU ops
    if "v4" in kind or "v5" in kind:
        return jnp.float32, jnp.bfloat16           # f32 tanh, bf16 MXU operands
    return jnp.float32, jnp.float32


def _pick_tile_n(n, num_tc):
    """Batch/generation-aware lane tile.

    Big tiles amortize the ~0.35us per-grid-step overhead (>=512 lanes reaches
    ~85% of roofline on mem-bound patterns); the step count is kept >= and a
    multiple of the TensorCore count so megacore/v7x chips get balanced work;
    capped at 2048 so the two live (H*h1, TN) f32 activations stay cheap.
    """
    if n % 128 != 0:
        return n                                   # full-array block (legal)
    max_tile = min(n, 2048)
    cands = [t for t in range(128, max_tile + 1, 128) if n % t == 0]
    balanced = [t for t in cands
                if (n // t) >= num_tc and (n // t) % num_tc == 0]
    pool = balanced if balanced else cands
    return max(pool)


# ---------------------------------------------------------------------------
# Forward wrapper
# ---------------------------------------------------------------------------
def mhpinn_forward(r, params, *, tile_n=None, precision="auto",
                   r_is_transposed=False):
    """Fused multi-head PINN forward.

    r : (n, d_in) collocation points, or (d_in, n) if r_is_transposed=True
        (preferred for large n: avoids an extra O(n*d_in) HBM transpose pass).
    precision : "float32" | "bfloat16" | "auto" (generation-tuned).
    """
    if r_is_transposed:
        d_in, n = r.shape
        rt = r.astype(jnp.float32)
    else:
        n, d_in = r.shape
        rt = r.astype(jnp.float32).T

    if precision == "float32":
        act_dtype, matmul_dtype = jnp.float32, jnp.float32
    elif precision == "bfloat16":
        act_dtype, matmul_dtype = jnp.bfloat16, jnp.bfloat16
    else:
        act_dtype, matmul_dtype = _auto_dtypes()

    num_tc = _num_tensorcores()
    if tile_n is None:
        tile_n = _pick_tile_n(n, num_tc)
    assert n % tile_n == 0, "batch must be a multiple of tile_n"
    assert tile_n == n or tile_n % 128 == 0, (
        "tile_n must be a multiple of 128 (lane tiling) or equal to the batch")

    w1t, b1c, w2t, b2c, woutt, bfin = _fuse_params(params, matmul_dtype)
    hh1 = w1t.shape[0]

    kernel = _make_kernel(d_in, act_dtype, matmul_dtype)

    weight_bytes = int(sum(int(x.size) * x.dtype.itemsize
                           for x in (w1t, b1c, w2t, b2c, woutt, bfin)))
    cost = pl.CostEstimate(
        flops=2 * n * (hh1 * d_in + hh1 * hh1 + hh1),
        transcendentals=2 * n * hh1,
        bytes_accessed=4 * n * (d_in + 1) + weight_bytes,
    )

    def _call(single_buffer_weights):
        def wspec(arr):
            nd = arr.ndim
            kw = {}
            if single_buffer_weights:
                # Grid-invariant operands: no need to double-buffer them.
                kw["pipeline_mode"] = pl.Buffered(1)
            return pl.BlockSpec(arr.shape, lambda i, _nd=nd: (0,) * _nd, **kw)

        return pl.pallas_call(
            kernel,
            out_shape=jax.ShapeDtypeStruct((1, n), jnp.float32),
            grid_spec=pltpu.PrefetchScalarGridSpec(
                num_scalar_prefetch=0,
                grid=(n // tile_n,),
                in_specs=[
                    pl.BlockSpec((d_in, tile_n), lambda i: (0, i)),   # input tile
                    wspec(w1t), wspec(b1c),
                    wspec(w2t), wspec(b2c),
                    wspec(woutt), wspec(bfin),
                ],
                out_specs=pl.BlockSpec((1, tile_n), lambda i: (0, i)),
            ),
            compiler_params=pltpu.CompilerParams(
                dimension_semantics=("parallel",)),
            cost_estimate=cost,
        )(rt, w1t, b1c, w2t, b2c, woutt, bfin)

    try:
        out = _call(True)     # single-buffer the grid-invariant weights
    except Exception:
        out = _call(False)    # fall back if Buffered(1) isn't supported here

    return out.reshape(n, 1)


# ---------------------------------------------------------------------------
# Pure-JAX reference of the PyTorch forward (concat heads -> end_net)
# ---------------------------------------------------------------------------
def mhpinn_reference(r, params):
    w1, b1, w2, b2, w3, b3, we, be = (
        params["w1"], params["b1"], params["w2"], params["b2"],
        params["w3"], params["b3"], params["we"], params["be"])
    head_outs = []
    for h in range(w1.shape[0]):
        z = jnp.tanh(r @ w1[h] + b1[h])
        z = jnp.tanh(z @ w2[h] + b2[h])
        head_outs.append(z @ w3[h] + b3[h])
    y = jnp.concatenate(head_outs, axis=1)        # (N, H * head_out)
    we_flat = we.reshape(-1, 1)                   # (H * head_out, 1)
    return y @ we_flat + be                       # (N, 1)


def init_params(key, head_nums, layers):
    """Deterministic init. layers = [d_in, h1, h1, head_out] (2 hidden layers)."""
    d_in, h1, h2, d_out = layers
    assert h1 == h2, "this script fixes both hidden layers to the same width"
    ks = jax.random.split(key, 8)
    scale = 0.5
    return {
        "w1": scale * jax.random.normal(ks[0], (head_nums, d_in, h1), jnp.float32),
        "b1": scale * jax.random.normal(ks[1], (head_nums, h1), jnp.float32),
        "w2": scale * jax.random.normal(ks[2], (head_nums, h1, h1), jnp.float32),
        "b2": scale * jax.random.normal(ks[3], (head_nums, h1), jnp.float32),
        "w3": scale * jax.random.normal(ks[4], (head_nums, h1, d_out), jnp.float32),
        "b3": scale * jax.random.normal(ks[5], (head_nums, d_out), jnp.float32),
        # end_net = single Linear(head_nums * d_out, 1)
        "we": scale * jax.random.normal(ks[6], (head_nums, d_out, 1), jnp.float32),
        "be": scale * jax.random.normal(ks[7], (1, 1), jnp.float32),
    }


if __name__ == "__main__":
    key = jax.random.PRNGKey(0)
    k_r, k_p = jax.random.split(key)

    head_nums = 4
    layers = [2, 32, 32, 4]   # [input_dim, hidden, hidden, per-head output]
    n = 256                   # number of collocation points (batch)

    # Produce collocation points directly in the kernel's preferred (d_in, n)
    # layout -> no extra O(n*d_in) HBM transpose pass in the wrapper.
    rt = jax.random.normal(k_r, (layers[0], n), jnp.float32)
    r = rt.T
    params = init_params(k_p, head_nums, layers)

    # Exact (f32) path. Generation-aware tiling: grid=(1,) on single-TC chips
    # (v5e/v6e) at this small batch, balanced 2-step grid on megacore/v7x.
    out = mhpinn_forward(rt, params, precision="float32", r_is_transposed=True)
    out = jax.block_until_ready(out)

    ref = mhpinn_reference(r, params)
    assert out.shape == (n, 1)
    # The w3·we / bias folding + VPU first layer reassociate f32 ops;
    # differences stay well inside this tolerance for O(1) activations.
    assert jnp.allclose(out, ref, atol=1e-3, rtol=1e-3), "f32 kernel mismatch vs reference"

    # Generation-tuned fast path: bf16 tanh + bf16 MXU operands on v6e/v7x,
    # f32 tanh + bf16 MXU operands on v4/v5, f32 accumulation everywhere.
    # Loose smoke check only — bf16 activations need accuracy validation
    # before being used for differentiated PDE residuals.
    out_fast = mhpinn_forward(rt, params, precision="auto", r_is_transposed=True)
    out_fast = jax.block_until_ready(out_fast)
    assert bool(jnp.all(jnp.isfinite(out_fast))), "fast-path produced non-finite values"
    assert bool(jnp.allclose(out_fast, out, atol=0.5, rtol=0.05)), "fast-path output diverged"

    # TODO(synk): the autograd-based methods (f, bc, loss_func) of the PyTorch
    # module are training-time utilities and are not part of this forward kernel.

    print("KERNEL_OK")
</pallas_src>

<mosaic_0001>
module attributes {stable_mosaic.version = 11 : i64} {
  func.func @mhpinn_kernel(%arg0: i32, %arg1: memref<2x256xf32, #tpu.memory_space<vmem>>, %arg2: memref<128x2xf32, #tpu.memory_space<vmem>>, %arg3: memref<128x1xf32, #tpu.memory_space<vmem>>, %arg4: memref<128x128xf32, #tpu.memory_space<vmem>>, %arg5: memref<128x1xf32, #tpu.memory_space<vmem>>, %arg6: memref<1x128xf32, #tpu.memory_space<vmem>>, %arg7: memref<1x1xf32, #tpu.memory_space<vmem>>, %arg8: memref<1x256xf32, #tpu.memory_space<vmem>>) attributes {dimension_semantics = [#tpu.dimension_semantics<parallel>], iteration_bounds = array<i64: 1>, scalar_prefetch = 0 : i64, scratch_operands = 0 : i64, tpu.core_type = #tpu.core_type<tc>, window_params = [{transform_indices = @transform_0, window_bounds = array<i64: 2, 256>}, {pipeline_mode = #tpu.pipeline_mode<synchronous>, transform_indices = @transform_1, window_bounds = array<i64: 128, 2>}, {pipeline_mode = #tpu.pipeline_mode<synchronous>, transform_indices = @transform_2, window_bounds = array<i64: 128, 1>}, {pipeline_mode = #tpu.pipeline_mode<synchronous>, transform_indices = @transform_3, window_bounds = array<i64: 128, 128>}, {pipeline_mode = #tpu.pipeline_mode<synchronous>, transform_indices = @transform_4, window_bounds = array<i64: 128, 1>}, {pipeline_mode = #tpu.pipeline_mode<synchronous>, transform_indices = @transform_5, window_bounds = array<i64: 1, 128>}, {pipeline_mode = #tpu.pipeline_mode<synchronous>, transform_indices = @transform_6, window_bounds = array<i64: 1, 1>}, {transform_indices = @transform_7, window_bounds = array<i64: 1, 256>}]} {
    %c0 = arith.constant 0 : index
    %c0_0 = arith.constant 0 : index
    %0 = vector.load %arg1[%c0, %c0_0] : memref<2x256xf32, #tpu.memory_space<vmem>>, vector<2x256xf32>
    %c0_1 = arith.constant 0 : index
    %c0_2 = arith.constant 0 : index
    %1 = vector.load %arg2[%c0_1, %c0_2] : memref<128x2xf32, #tpu.memory_space<vmem>>, vector<128x2xf32>
    %c0_3 = arith.constant 0 : index
    %c0_4 = arith.constant 0 : index
    %2 = vector.load %arg3[%c0_3, %c0_4] : memref<128x1xf32, #tpu.memory_space<vmem>>, vector<128x1xf32>
    %3 = vector.extract_strided_slice %1 {offsets = [0, 0], sizes = [128, 1], strides = [1, 1]} : vector<128x2xf32> to vector<128x1xf32>
    %4 = vector.extract_strided_slice %0 {offsets = [0, 0], sizes = [1, 256], strides = [1, 1]} : vector<2x256xf32> to vector<1x256xf32>
    %5 = vector.broadcast %3 : vector<128x1xf32> to vector<128x256xf32>
    %6 = vector.broadcast %4 : vector<1x256xf32> to vector<128x256xf32>
    %7 = arith.mulf %5, %6 : vector<128x256xf32>
    %8 = vector.broadcast %2 : vector<128x1xf32> to vector<128x256xf32>
    %9 = arith.addf %8, %7 : vector<128x256xf32>
    %10 = vector.extract_strided_slice %1 {offsets = [0, 1], sizes = [128, 1], strides = [1, 1]} : vector<128x2xf32> to vector<128x1xf32>
    %11 = vector.extract_strided_slice %0 {offsets = [1, 0], sizes = [1, 256], strides = [1, 1]} : vector<2x256xf32> to vector<1x256xf32>
    %12 = vector.broadcast %10 : vector<128x1xf32> to vector<128x256xf32>
    %13 = vector.broadcast %11 : vector<1x256xf32> to vector<128x256xf32>
    %14 = arith.mulf %12, %13 : vector<128x256xf32>
    %15 = arith.addf %9, %14 : vector<128x256xf32>
    %16 = math.tanh %15 : vector<128x256xf32>
    %c0_5 = arith.constant 0 : index
    %c0_6 = arith.constant 0 : index
    %17 = vector.load %arg4[%c0_5, %c0_6] : memref<128x128xf32, #tpu.memory_space<vmem>>, vector<128x128xf32>
    %cst = arith.constant dense<0.000000e+00> : vector<128x256xf32>
    %18 = tpu.matmul %17, %16, %cst {dimension_numbers = #tpu.dot_dimension_numbers<[1], [0], [0], [1], [0, 0, 1, 1], [], []>} : vector<128x128xf32>, vector<128x256xf32>, vector<128x256xf32> -> vector<128x256xf32>
    %c0_7 = arith.constant 0 : index
    %c0_8 = arith.constant 0 : index
    %19 = vector.load %arg5[%c0_7, %c0_8] : memref<128x1xf32, #tpu.memory_space<vmem>>, vector<128x1xf32>
    %20 = vector.broadcast %19 : vector<128x1xf32> to vector<128x256xf32>
    %21 = arith.addf %18, %20 : vector<128x256xf32>
    %22 = math.tanh %21 : vector<128x256xf32>
    %c0_9 = arith.constant 0 : index
    %c0_10 = arith.constant 0 : index
    %23 = vector.load %arg6[%c0_9, %c0_10] : memref<1x128xf32, #tpu.memory_space<vmem>>, vector<1x128xf32>
    %cst_11 = arith.constant dense<0.000000e+00> : vector<1x256xf32>
    %24 = tpu.matmul %23, %22, %cst_11 {dimension_numbers = #tpu.dot_dimension_numbers<[1], [0], [0], [1], [0, 0, 1, 1], [], []>} : vector<1x128xf32>, vector<128x256xf32>, vector<1x256xf32> -> vector<1x256xf32>
    %c0_12 = arith.constant 0 : index
    %c0_13 = arith.constant 0 : index
    %25 = vector.load %arg7[%c0_12, %c0_13] : memref<1x1xf32, #tpu.memory_space<vmem>>, vector<1x1xf32>
    %26 = vector.broadcast %25 : vector<1x1xf32> to vector<1x256xf32>
    %27 = arith.addf %24, %26 : vector<1x256xf32>
    %c0_14 = arith.constant 0 : index
    %c0_15 = arith.constant 0 : index
    %28 = vector.load %arg8[%c0_14, %c0_15] : memref<1x256xf32, #tpu.memory_space<vmem>>, vector<1x256xf32>
    tpu.vector_store %arg8[%c0_14, %c0_15], %27 {strides = array<i32>} : memref<1x256xf32, #tpu.memory_space<vmem>>, vector<1x256xf32>,
    return
  }
  func.func @transform_0(%arg0: i32) -> (i32, i32) {
    %c0_i32 = arith.constant 0 : i32
    %c0_i32_0 = arith.constant 0 : i32
    return %c0_i32, %arg0 : i32, i32
  }
  func.func @transform_1(%arg0: i32) -> (i32, i32) {
    %c0_i32 = arith.constant 0 : i32
    %c0_i32_0 = arith.constant 0 : i32
    %c0_i32_1 = arith.constant 0 : i32
    return %c0_i32, %c0_i32_0 : i32, i32
  }
  func.func @transform_2(%arg0: i32) -> (i32, i32) {
    %c0_i32 = arith.constant 0 : i32
    %c0_i32_0 = arith.constant 0 : i32
    %c0_i32_1 = arith.constant 0 : i32
    return %c0_i32, %c0_i32_0 : i32, i32
  }
  func.func @transform_3(%arg0: i32) -> (i32, i32) {
    %c0_i32 = arith.constant 0 : i32
    %c0_i32_0 = arith.constant 0 : i32
    %c0_i32_1 = arith.constant 0 : i32
    return %c0_i32, %c0_i32_0 : i32, i32
  }
  func.func @transform_4(%arg0: i32) -> (i32, i32) {
    %c0_i32 = arith.constant 0 : i32
    %c0_i32_0 = arith.constant 0 : i32
    %c0_i32_1 = arith.constant 0 : i32
    return %c0_i32, %c0_i32_0 : i32, i32
  }
  func.func @transform_5(%arg0: i32) -> (i32, i32) {
    %c0_i32 = arith.constant 0 : i32
    %c0_i32_0 = arith.constant 0 : i32
    %c0_i32_1 = arith.constant 0 : i32
    return %c0_i32, %c0_i32_0 : i32, i32
  }
  func.func @transform_6(%arg0: i32) -> (i32, i32) {
    %c0_i32 = arith.constant 0 : i32
    %c0_i32_0 = arith.constant 0 : i32
    %c0_i32_1 = arith.constant 0 : i32
    return %c0_i32, %c0_i32_0 : i32, i32
  }
  func.func @transform_7(%arg0: i32) -> (i32, i32) {
    %c0_i32 = arith.constant 0 : i32
    %c0_i32_0 = arith.constant 0 : i32
    return %c0_i32, %arg0 : i32, i32
  }
}

module attributes {stable_mosaic.version = 11 : i64} {
  func.func @mhpinn_kernel(%arg0: i32, %arg1: memref<2x256xf32, #tpu.memory_space<vmem>>, %arg2: memref<128x2xf32, #tpu.memory_space<vmem>>, %arg3: memref<128x1xf32, #tpu.memory_space<vmem>>, %arg4: memref<128x128xf32, #tpu.memory_space<vmem>>, %arg5: memref<128x1xf32, #tpu.memory_space<vmem>>, %arg6: memref<1x128xf32, #tpu.memory_space<vmem>>, %arg7: memref<1x1xf32, #tpu.memory_space<vmem>>, %arg8: memref<1x256xf32, #tpu.memory_space<vmem>>) attributes {dimension_semantics = [#tpu.dimension_semantics<parallel>], iteration_bounds = array<i64: 1>, scalar_prefetch = 0 : i64, scratch_operands = 0 : i64, tpu.core_type = #tpu.core_type<tc>, window_params = [{transform_indices = @transform_0, window_bounds = array<i64: 2, 256>}, {pipeline_mode = #tpu.pipeline_mode<synchronous>, transform_indices = @transform_1, window_bounds = array<i64: 128, 2>}, {pipeline_mode = #tpu.pipeline_mode<synchronous>, transform_indices = @transform_2, window_bounds = array<i64: 128, 1>}, {pipeline_mode = #tpu.pipeline_mode<synchronous>, transform_indices = @transform_3, window_bounds = array<i64: 128, 128>}, {pipeline_mode = #tpu.pipeline_mode<synchronous>, transform_indices = @transform_4, window_bounds = array<i64: 128, 1>}, {pipeline_mode = #tpu.pipeline_mode<synchronous>, transform_indices = @transform_5, window_bounds = array<i64: 1, 128>}, {pipeline_mode = #tpu.pipeline_mode<synchronous>, transform_indices = @transform_6, window_bounds = array<i64: 1, 1>}, {transform_indices = @transform_7, window_bounds = array<i64: 1, 256>}]} {
    %c0 = arith.constant 0 : index
    %c0_0 = arith.constant 0 : index
    %0 = vector.load %arg1[%c0, %c0_0] : memref<2x256xf32, #tpu.memory_space<vmem>>, vector<2x256xf32>
    %c0_1 = arith.constant 0 : index
    %c0_2 = arith.constant 0 : index
    %1 = vector.load %arg2[%c0_1, %c0_2] : memref<128x2xf32, #tpu.memory_space<vmem>>, vector<128x2xf32>
    %c0_3 = arith.constant 0 : index
    %c0_4 = arith.constant 0 : index
    %2 = vector.load %arg3[%c0_3, %c0_4] : memref<128x1xf32, #tpu.memory_space<vmem>>, vector<128x1xf32>
    %3 = vector.extract_strided_slice %1 {offsets = [0, 0], sizes = [128, 1], strides = [1, 1]} : vector<128x2xf32> to vector<128x1xf32>
    %4 = vector.extract_strided_slice %0 {offsets = [0, 0], sizes = [1, 256], strides = [1, 1]} : vector<2x256xf32> to vector<1x256xf32>
    %5 = vector.broadcast %3 : vector<128x1xf32> to vector<128x256xf32>
    %6 = vector.broadcast %4 : vector<1x256xf32> to vector<128x256xf32>
    %7 = arith.mulf %5, %6 : vector<128x256xf32>
    %8 = vector.broadcast %2 : vector<128x1xf32> to vector<128x256xf32>
    %9 = arith.addf %8, %7 : vector<128x256xf32>
    %10 = vector.extract_strided_slice %1 {offsets = [0, 1], sizes = [128, 1], strides = [1, 1]} : vector<128x2xf32> to vector<128x1xf32>
    %11 = vector.extract_strided_slice %0 {offsets = [1, 0], sizes = [1, 256], strides = [1, 1]} : vector<2x256xf32> to vector<1x256xf32>
    %12 = vector.broadcast %10 : vector<128x1xf32> to vector<128x256xf32>
    %13 = vector.broadcast %11 : vector<1x256xf32> to vector<128x256xf32>
    %14 = arith.mulf %12, %13 : vector<128x256xf32>
    %15 = arith.addf %9, %14 : vector<128x256xf32>
    %16 = math.tanh %15 : vector<128x256xf32>
    %c0_5 = arith.constant 0 : index
    %c0_6 = arith.constant 0 : index
    %17 = vector.load %arg4[%c0_5, %c0_6] : memref<128x128xf32, #tpu.memory_space<vmem>>, vector<128x128xf32>
    %cst = arith.constant dense<0.000000e+00> : vector<128x256xf32>
    %18 = tpu.matmul %17, %16, %cst {dimension_numbers = #tpu.dot_dimension_numbers<[1], [0], [0], [1], [0, 0, 1, 1], [], []>} : vector<128x128xf32>, vector<128x256xf32>, vector<128x256xf32> -> vector<128x256xf32>
    %c0_7 = arith.constant 0 : index
    %c0_8 = arith.constant 0 : index
    %19 = vector.load %arg5[%c0_7, %c0_8] : memref<128x1xf32, #tpu.memory_space<vmem>>, vector<128x1xf32>
    %20 = vector.broadcast %19 : vector<128x1xf32> to vector<128x256xf32>
    %21 = arith.addf %18, %20 : vector<128x256xf32>
    %22 = math.tanh %21 : vector<128x256xf32>
    %c0_9 = arith.constant 0 : index
    %c0_10 = arith.constant 0 : index
    %23 = vector.load %arg6[%c0_9, %c0_10] : memref<1x128xf32, #tpu.memory_space<vmem>>, vector<1x128xf32>
    %cst_11 = arith.constant dense<0.000000e+00> : vector<1x256xf32>
    %24 = tpu.matmul %23, %22, %cst_11 {dimension_numbers = #tpu.dot_dimension_numbers<[1], [0], [0], [1], [0, 0, 1, 1], [], []>} : vector<1x128xf32>, vector<128x256xf32>, vector<1x256xf32> -> vector<1x256xf32>
    %c0_12 = arith.constant 0 : index
    %c0_13 = arith.constant 0 : index
    %25 = vector.load %arg7[%c0_12, %c0_13] : memref<1x1xf32, #tpu.memory_space<vmem>>, vector<1x1xf32>
    %26 = vector.broadcast %25 : vector<1x1xf32> to vector<1x256xf32>
    %27 = arith.addf %24, %26 : vector<1x256xf32>
    %c0_14 = arith.constant 0 : index
    %c0_15 = arith.constant 0 : index
    %28 = vector.load %arg8[%c0_14, %c0_15] : memref<1x256xf32, #tpu.memory_space<vmem>>, vector<1x256xf32>
    tpu.vector_store %arg8[%c0_14, %c0_15], %27 {strides = array<i32>} : memref<1x256xf32, #tpu.memory_space<vmem>>, vector<1x256xf32>,
    return
  }
  func.func @transform_0(%arg0: i32) -> (i32, i32) {
    %c0_i32 = arith.constant 0 : i32
    %c0_i32_0 = arith.constant 0 : i32
    return %c0_i32, %arg0 : i32, i32
  }
  func.func @transform_1(%arg0: i32) -> (i32, i32) {
    %c0_i32 = arith.constant 0 : i32
    %c0_i32_0 = arith.constant 0 : i32
    %c0_i32_1 = arith.constant 0 : i32
    return %c0_i32, %c0_i32_0 : i32, i32
  }
  func.func @transform_2(%arg0: i32) -> (i32, i32) {
    %c0_i32 = arith.constant 0 : i32
    %c0_i32_0 = arith.constant 0 : i32
    %c0_i32_1 = arith.constant 0 : i32
    return %c0_i32, %c0_i32_0 : i32, i32
  }
  func.func @transform_3(%arg0: i32) -> (i32, i32) {
    %c0_i32 = arith.constant 0 : i32
    %c0_i32_0 = arith.constant 0 : i32
    %c0_i32_1 = arith.constant 0 : i32
    return %c0_i32, %c0_i32_0 : i32, i32
  }
  func.func @transform_4(%arg0: i32) -> (i32, i32) {
    %c0_i32 = arith.constant 0 : i32
    %c0_i32_0 = arith.constant 0 : i32
    %c0_i32_1 = arith.constant 0 : i32
    return %c0_i32, %c0_i32_0 : i32, i32
  }
  func.func @transform_5(%arg0: i32) -> (i32, i32) {
    %c0_i32 = arith.constant 0 : i32
    %c0_i32_0 = arith.constant 0 : i32
    %c0_i32_1 = arith.constant 0 : i32
    return %c0_i32, %c0_i32_0 : i32, i32
  }
  func.func @transform_6(%arg0: i32) -> (i32, i32) {
    %c0_i32 = arith.constant 0 : i32
    %c0_i32_0 = arith.constant 0 : i32
    %c0_i32_1 = arith.constant 0 : i32
    return %c0_i32, %c0_i32_0 : i32, i32
  }
  func.func @transform_7(%arg0: i32) -> (i32, i32) {
    %c0_i32 = arith.constant 0 : i32
    %c0_i32_0 = arith.constant 0 : i32
    return %c0_i32, %arg0 : i32, i32
  }
}

</mosaic_0001>

<llo_original>
// kernel: tpu_custom_call.1
$region0: #{tpu_custom_call.1}
  #allocation0 [shape = 'u32[]', space=smem, size = 0x4, offset = 0x4, fixed_abs, tag = 'smem constant byte address 0x4 - core index']
  #allocation1 [shape = 'u32[144,128]{1,0:T(1,128)}', space=vmem, size = 0x12000, scoped, tag = 'internal scratch']
  #allocation2 [shape = 'f32[1,1]{1,0:T(1,128)S(1)}', space=vmem, size = 0x200, scoped, tag = 'scoped memory for tpu_custom_call.1']
  %s0 = inlined_call_operand.vmem [shape: f32[2,256], index: 0, kind: input, shape index: {}]
  %s1 = inlined_call_operand.vmem [shape: f32[128,2], index: 1, kind: input, shape index: {}]
  %s2 = inlined_call_operand.vmem [shape: f32[128,1], index: 2, kind: input, shape index: {}]
  %s3 = inlined_call_operand.vmem [shape: f32[128,128], index: 3, kind: input, shape index: {}]
  %s4 = inlined_call_operand.vmem [shape: f32[128,1], index: 4, kind: input, shape index: {}]
  %s5 = inlined_call_operand.vmem [shape: f32[1,128], index: 5, kind: input, shape index: {}]
  %s6 = inlined_call_operand.<no memory space> [shape: f32[1,1], index: 6, kind: input, shape index: {}]
  %s7 = inlined_call_operand.hbm [shape: f32[1,256], index: 7, kind: output, shape index: {}]
  %s8 = sld [smem:[#allocation0]]
  $region38: #{tpu_custom_call.1} parent=0
    _
  %s10 = ssub.s32 1, %s8
  %s11 = scalar_select 0, %s10, %s8
  %v12 = vstv %s6
  %13 = vst [vmem:[#allocation2] sm:$0x1] %v12
  $region1: #{tpu_custom_call.1} parent=0
    #allocation3 [shape = 'u8[1024]{0}', space=vmem, size = 0x400, scoped, tag = 'output window, operand 0, single buffered']
    #allocation4 [shape = 's32[1]{0}', space=sflag, size = 0x4, scoped, tag = 'scoped memory for tpu_custom_call.1']
    %14 = vsyncpa [#allocation4], 0
    // Predicated region
    $region2: #{tpu_custom_call.1} parent=1 // pred_check
      _
    $region3: #{tpu_custom_call.1} parent=1 // pred_check_branch
      %16 = sbr.rel (0) target = $region5
    $region4: #{tpu_custom_call.1} parent=1 // pred_region
      _
    $region5: #{tpu_custom_call.1} parent=1 // pred_fallthru
      _
    // Predicated region
    $region6: #{tpu_custom_call.1} parent=1 // pred_check
      _
    $region7: #{tpu_custom_call.1} parent=1 // pred_check_branch
      %18 = sbr.rel (0) target = $region9
    $region8: #{tpu_custom_call.1} parent=1 // pred_region
      _
    $region9: #{tpu_custom_call.1} parent=1 // pred_fallthru
      _
    // Predicated region
    $region10: #{tpu_custom_call.1} parent=1 // pred_check
      _
    $region11: #{tpu_custom_call.1} parent=1 // pred_check_branch
      %20 = sbr.rel (0) target = $region13
    $region12: #{tpu_custom_call.1} parent=1 // pred_region
      _
    $region13: #{tpu_custom_call.1} parent=1 // pred_fallthru
      _
    // Predicated region
    $region14: #{tpu_custom_call.1} parent=1 // pred_check
      _
    $region15: #{tpu_custom_call.1} parent=1 // pred_check_branch
      %22 = sbr.rel (0) target = $region17
    $region16: #{tpu_custom_call.1} parent=1 // pred_region
      _
    $region17: #{tpu_custom_call.1} parent=1 // pred_fallthru
      _
    // Predicated region
    $region18: #{tpu_custom_call.1} parent=1 // pred_check
      _
    $region19: #{tpu_custom_call.1} parent=1 // pred_check_branch
      %24 = sbr.rel (0) target = $region21
    $region20: #{tpu_custom_call.1} parent=1 // pred_region
      _
    $region21: #{tpu_custom_call.1} parent=1 // pred_fallthru
      _
    // Predicated region
    $region22: #{tpu_custom_call.1} parent=1 // pred_check
      _
    $region23: #{tpu_custom_call.1} parent=1 // pred_check_branch
      %26 = sbr.rel (0) target = $region25
    $region24: #{tpu_custom_call.1} parent=1 // pred_region
      _
    $region25: #{tpu_custom_call.1} parent=1 // pred_fallthru
      _
    // Predicated region
    $region26: #{tpu_custom_call.1} parent=1 // pred_check
      _
    $region27: #{tpu_custom_call.1} parent=1 // pred_check_branch
      %28 = sbr.rel (0) target = $region29
    $region28: #{tpu_custom_call.1} parent=1 // pred_region
      _
    $region29: #{tpu_custom_call.1} parent=1 // pred_fallthru
      _
    %v29 = vld [vmem:[%s0] sm:$0xf]
    %v30 = vld [vmem:[%s1] sm:$0xff]
    %v31 = vld [vmem:[%s1 + $0x8] sm:$0xff]
    %v32 = vld [vmem:[%s1 + $0x10] sm:$0xff]
    %v33 = vld [vmem:[%s1 + $0x18] sm:$0xff]
    %v34 = vld [vmem:[%s1 + $0x20] sm:$0xff]
    %v35 = vld [vmem:[%s1 + $0x28] sm:$0xff]
    %v36 = vld [vmem:[%s1 + $0x30] sm:$0xff]
    %v37 = vld [vmem:[%s1 + $0x38] sm:$0xff]
    %v38 = vld [vmem:[%s1 + $0x40] sm:$0xff]
    %v39 = vld [vmem:[%s1 + $0x48] sm:$0xff]
    %v40 = vld [vmem:[%s1 + $0x50] sm:$0xff]
    %v41 = vld [vmem:[%s1 + $0x58] sm:$0xff]
    %v42 = vld [vmem:[%s1 + $0x60] sm:$0xff]
    %v43 = vld [vmem:[%s1 + $0x68] sm:$0xff]
    %v44 = vld [vmem:[%s1 + $0x70] sm:$0xff]
    %v45 = vld [vmem:[%s1 + $0x78] sm:$0xff]
    %v46 = vld [vmem:[%s2] sm:$0xff]
    %v47 = vld [vmem:[%s2 + $0x8] sm:$0xff]
    %v48 = vld [vmem:[%s2 + $0x10] sm:$0xff]
    %v49 = vld [vmem:[%s2 + $0x18] sm:$0xff]
    %v50 = vld [vmem:[%s2 + $0x20] sm:$0xff]
    %v51 = vld [vmem:[%s2 + $0x28] sm:$0xff]
    %v52 = vld [vmem:[%s2 + $0x30] sm:$0xff]
    %v53 = vld [vmem:[%s2 + $0x38] sm:$0xff]
    %v54 = vld [vmem:[%s2 + $0x40] sm:$0xff]
    %v55 = vld [vmem:[%s2 + $0x48] sm:$0xff]
    %v56 = vld [vmem:[%s2 + $0x50] sm:$0xff]
    %v57 = vld [vmem:[%s2 + $0x58] sm:$0xff]
    %v58 = vld [vmem:[%s2 + $0x60] sm:$0xff]
    %v59 = vld [vmem:[%s2 + $0x68] sm:$0xff]
    %v60 = vld [vmem:[%s2 + $0x70] sm:$0xff]
    %v61 = vld [vmem:[%s2 + $0x78] sm:$0xff]
    %63 = vset.pattern.permute.xlu0 0
    %64 = vperm.xlu0 %63, %v30
    %v65 = vpop.permute.xlu0 %64
    %68 = vset.pattern.permute.xlu0 0
    %69 = vperm.xlu0 %68, %v31
    %v70 = vpop.permute.xlu0 %69
    %73 = vset.pattern.permute.xlu0 0
    %74 = vperm.xlu0 %73, %v32
    %v75 = vpop.permute.xlu0 %74
    %78 = vset.pattern.permute.xlu0 0
    %79 = vperm.xlu0 %78, %v33
    %v80 = vpop.permute.xlu0 %79
    %83 = vset.pattern.permute.xlu0 0
    %84 = vperm.xlu0 %83, %v34
    %v85 = vpop.permute.xlu0 %84
    %88 = vset.pattern.permute.xlu0 0
    %89 = vperm.xlu0 %88, %v35
    %v90 = vpop.permute.xlu0 %89
    %93 = vset.pattern.permute.xlu0 0
    %94 = vperm.xlu0 %93, %v36
    %v95 = vpop.permute.xlu0 %94
    %98 = vset.pattern.permute.xlu0 0
    %99 = vperm.xlu0 %98, %v37
    %v100 = vpop.permute.xlu0 %99
    %103 = vset.pattern.permute.xlu0 0
    %104 = vperm.xlu0 %103, %v38
    %v105 = vpop.permute.xlu0 %104
    %108 = vset.pattern.permute.xlu0 0
    %109 = vperm.xlu0 %108, %v39
    %v110 = vpop.permute.xlu0 %109
    %113 = vset.pattern.permute.xlu0 0
    %114 = vperm.xlu0 %113, %v40
    %v115 = vpop.permute.xlu0 %114
    %118 = vset.pattern.permute.xlu0 0
    %119 = vperm.xlu0 %118, %v41
    %v120 = vpop.permute.xlu0 %119
    %123 = vset.pattern.permute.xlu0 0
    %124 = vperm.xlu0 %123, %v42
    %v125 = vpop.permute.xlu0 %124
    %128 = vset.pattern.permute.xlu0 0
    %129 = vperm.xlu0 %128, %v43
    %v130 = vpop.permute.xlu0 %129
    %133 = vset.pattern.permute.xlu0 0
    %134 = vperm.xlu0 %133, %v44
    %v135 = vpop.permute.xlu0 %134
    %138 = vset.pattern.permute.xlu0 0
    %139 = vperm.xlu0 %138, %v45
    %v140 = vpop.permute.xlu0 %139
    %v143 = vlaneseq
    %v144 = vshrl.u32 %v143, 7
    %v145 = vsub.s32 0, %v144
    %v146 = vrot.slane %v29, %v145
    %v147 = vlaneseq
    %v148 = vshrl.u32 %v147, 7
    %v149 = vsub.s32 2, %v148
    %v150 = vrot.slane %v29, %v149
    %v153 = vlaneseq
    %v154 = vshrl.u32 %v153, 7
    %v155 = vsub.s32 0, %v154
    %v156 = vrot.slane %v146, %v155
    %v157 = vlaneseq
    %v158 = vshrl.u32 %v157, 7
    %v159 = vsub.s32 0, %v158
    %v160 = vrot.slane %v150, %v159
    %v161 = vmul.f32 %v65, %v156
    %v162 = vmul.f32 %v65, %v160
    %v163 = vmul.f32 %v70, %v156
    %v164 = vmul.f32 %v70, %v160
    %v165 = vmul.f32 %v75, %v156
    %v166 = vmul.f32 %v75, %v160
    %v167 = vmul.f32 %v80, %v156
    %v168 = vmul.f32 %v80, %v160
    %v169 = vmul.f32 %v85, %v156
    %v170 = vmul.f32 %v85, %v160
    %v171 = vmul.f32 %v90, %v156
    %v172 = vmul.f32 %v90, %v160
    %v173 = vmul.f32 %v95, %v156
    %v174 = vmul.f32 %v95, %v160
    %v175 = vmul.f32 %v100, %v156
    %v176 = vmul.f32 %v100, %v160
    %v177 = vmul.f32 %v105, %v156
    %v178 = vmul.f32 %v105, %v160
    %v179 = vmul.f32 %v110, %v156
    %v180 = vmul.f32 %v110, %v160
    %v181 = vmul.f32 %v115, %v156
    %v182 = vmul.f32 %v115, %v160
    %v183 = vmul.f32 %v120, %v156
    %v184 = vmul.f32 %v120, %v160
    %v185 = vmul.f32 %v125, %v156
    %v186 = vmul.f32 %v125, %v160
    %v187 = vmul.f32 %v130, %v156
    %v188 = vmul.f32 %v130, %v160
    %v189 = vmul.f32 %v135, %v156
    %v190 = vmul.f32 %v135, %v160
    %v191 = vmul.f32 %v140, %v156
    %v192 = vmul.f32 %v140, %v160
    %194 = vset.pattern.permute.xlu0 0
    %195 = vperm.xlu0 %194, %v46
    %v196 = vpop.permute.xlu0 %195
    %199 = vset.pattern.permute.xlu0 0
    %200 = vperm.xlu0 %199, %v47
    %v201 = vpop.permute.xlu0 %200
    %204 = vset.pattern.permute.xlu0 0
    %205 = vperm.xlu0 %204, %v48
    %v206 = vpop.permute.xlu0 %205
    %209 = vset.pattern.permute.xlu0 0
    %210 = vperm.xlu0 %209, %v49
    %v211 = vpop.permute.xlu0 %210
    %214 = vset.pattern.permute.xlu0 0
    %215 = vperm.xlu0 %214, %v50
    %v216 = vpop.permute.xlu0 %215
    %219 = vset.pattern.permute.xlu0 0
    %220 = vperm.xlu0 %219, %v51
    %v221 = vpop.permute.xlu0 %220
    %224 = vset.pattern.permute.xlu0 0
    %225 = vperm.xlu0 %224, %v52
    %v226 = vpop.permute.xlu0 %225
    %229 = vset.pattern.permute.xlu0 0
    %230 = vperm.xlu0 %229, %v53
    %v231 = vpop.permute.xlu0 %230
    %234 = vset.pattern.permute.xlu0 0
    %235 = vperm.xlu0 %234, %v54
    %v236 = vpop.permute.xlu0 %235
    %239 = vset.pattern.permute.xlu0 0
    %240 = vperm.xlu0 %239, %v55
    %v241 = vpop.permute.xlu0 %240
    %244 = vset.pattern.permute.xlu0 0
    %245 = vperm.xlu0 %244, %v56
    %v246 = vpop.permute.xlu0 %245
    %249 = vset.pattern.permute.xlu0 0
    %250 = vperm.xlu0 %249, %v57
    %v251 = vpop.permute.xlu0 %250
    %254 = vset.pattern.permute.xlu0 0
    %255 = vperm.xlu0 %254, %v58
    %v256 = vpop.permute.xlu0 %255
    %259 = vset.pattern.permute.xlu0 0
    %260 = vperm.xlu0 %259, %v59
    %v261 = vpop.permute.xlu0 %260
    %264 = vset.pattern.permute.xlu0 0
    %265 = vperm.xlu0 %264, %v60
    %v266 = vpop.permute.xlu0 %265
    %269 = vset.pattern.permute.xlu0 0
    %270 = vperm.xlu0 %269, %v61
    %v271 = vpop.permute.xlu0 %270
    %v273 = vadd.f32 %v196, %v161
    %v274 = vadd.f32 %v196, %v162
    %v275 = vadd.f32 %v201, %v163
    %v276 = vadd.f32 %v201, %v164
    %v277 = vadd.f32 %v206, %v165
    %v278 = vadd.f32 %v206, %v166
    %v279 = vadd.f32 %v211, %v167
    %v280 = vadd.f32 %v211, %v168
    %v281 = vadd.f32 %v216, %v169
    %v282 = vadd.f32 %v216, %v170
    %v283 = vadd.f32 %v221, %v171
    %v284 = vadd.f32 %v221, %v172
    %v285 = vadd.f32 %v226, %v173
    %v286 = vadd.f32 %v226, %v174
    %v287 = vadd.f32 %v231, %v175
    %v288 = vadd.f32 %v231, %v176
    %v289 = vadd.f32 %v236, %v177
    %v290 = vadd.f32 %v236, %v178
    %v291 = vadd.f32 %v241, %v179
    %v292 = vadd.f32 %v241, %v180
    %v293 = vadd.f32 %v246, %v181
    %v294 = vadd.f32 %v246, %v182
    %v295 = vadd.f32 %v251, %v183
    %v296 = vadd.f32 %v251, %v184
    %v297 = vadd.f32 %v256, %v185
    %v298 = vadd.f32 %v256, %v186
    %v299 = vadd.f32 %v261, %v187
    %v300 = vadd.f32 %v261, %v188
    %v301 = vadd.f32 %v266, %v189
    %v302 = vadd.f32 %v266, %v190
    %v303 = vadd.f32 %v271, %v191
    %v304 = vadd.f32 %v271, %v192
    %305 = vset.pattern.permute.xlu0 1
    %306 = vperm.xlu0 %305, %v30
    %v307 = vpop.permute.xlu0 %306
    %309 = vset.pattern.permute.xlu0 1
    %310 = vperm.xlu0 %309, %v31
    %v311 = vpop.permute.xlu0 %310
    %313 = vset.pattern.permute.xlu0 1
    %314 = vperm.xlu0 %313, %v32
    %v315 = vpop.permute.xlu0 %314
    %317 = vset.pattern.permute.xlu0 1
    %318 = vperm.xlu0 %317, %v33
    %v319 = vpop.permute.xlu0 %318
    %321 = vset.pattern.permute.xlu0 1
    %322 = vperm.xlu0 %321, %v34
    %v323 = vpop.permute.xlu0 %322
    %325 = vset.pattern.permute.xlu0 1
    %326 = vperm.xlu0 %325, %v35
    %v327 = vpop.permute.xlu0 %326
    %329 = vset.pattern.permute.xlu0 1
    %330 = vperm.xlu0 %329, %v36
    %v331 = vpop.permute.xlu0 %330
    %333 = vset.pattern.permute.xlu0 1
    %334 = vperm.xlu0 %333, %v37
    %v335 = vpop.permute.xlu0 %334
    %337 = vset.pattern.permute.xlu0 1
    %338 = vperm.xlu0 %337, %v38
    %v339 = vpop.permute.xlu0 %338
    %341 = vset.pattern.permute.xlu0 1
    %342 = vperm.xlu0 %341, %v39
    %v343 = vpop.permute.xlu0 %342
    %345 = vset.pattern.permute.xlu0 1
    %346 = vperm.xlu0 %345, %v40
    %v347 = vpop.permute.xlu0 %346
    %349 = vset.pattern.permute.xlu0 1
    %350 = vperm.xlu0 %349, %v41
    %v351 = vpop.permute.xlu0 %350
    %353 = vset.pattern.permute.xlu0 1
    %354 = vperm.xlu0 %353, %v42
    %v355 = vpop.permute.xlu0 %354
    %357 = vset.pattern.permute.xlu0 1
    %358 = vperm.xlu0 %357, %v43
    %v359 = vpop.permute.xlu0 %358
    %361 = vset.pattern.permute.xlu0 1
    %362 = vperm.xlu0 %361, %v44
    %v363 = vpop.permute.xlu0 %362
    %365 = vset.pattern.permute.xlu0 1
    %366 = vperm.xlu0 %365, %v45
    %v367 = vpop.permute.xlu0 %366
    %v369 = vlaneseq
    %v370 = vshrl.u32 %v369, 7
    %v371 = vsub.s32 1, %v370
    %v372 = vrot.slane %v29, %v371
    %v373 = vlaneseq
    %v374 = vshrl.u32 %v373, 7
    %v375 = vsub.s32 3, %v374
    %v376 = vrot.slane %v29, %v375
    %v379 = vlaneseq
    %v380 = vshrl.u32 %v379, 7
    %v381 = vsub.s32 1, %v380
    %v382 = vrot.slane %v372, %v381
    %v383 = vlaneseq
    %v384 = vshrl.u32 %v383, 7
    %v385 = vsub.s32 1, %v384
    %v386 = vrot.slane %v376, %v385
    %v387 = vmul.f32 %v307, %v382
    %v388 = vmul.f32 %v307, %v386
    %v389 = vmul.f32 %v311, %v382
    %v390 = vmul.f32 %v311, %v386
    %v391 = vmul.f32 %v315, %v382
    %v392 = vmul.f32 %v315, %v386
    %v393 = vmul.f32 %v319, %v382
    %v394 = vmul.f32 %v319, %v386
    %v395 = vmul.f32 %v323, %v382
    %v396 = vmul.f32 %v323, %v386
    %v397 = vmul.f32 %v327, %v382
    %v398 = vmul.f32 %v327, %v386
    %v399 = vmul.f32 %v331, %v382
    %v400 = vmul.f32 %v331, %v386
    %v401 = vmul.f32 %v335, %v382
    %v402 = vmul.f32 %v335, %v386
    %v403 = vmul.f32 %v339, %v382
    %v404 = vmul.f32 %v339, %v386
    %v405 = vmul.f32 %v343, %v382
    %v406 = vmul.f32 %v343, %v386
    %v407 = vmul.f32 %v347, %v382
    %v408 = vmul.f32 %v347, %v386
    %v409 = vmul.f32 %v351, %v382
    %v410 = vmul.f32 %v351, %v386
    %v411 = vmul.f32 %v355, %v382
    %v412 = vmul.f32 %v355, %v386
    %v413 = vmul.f32 %v359, %v382
    %v414 = vmul.f32 %v359, %v386
    %v415 = vmul.f32 %v363, %v382
    %v416 = vmul.f32 %v363, %v386
    %v417 = vmul.f32 %v367, %v382
    %v418 = vmul.f32 %v367, %v386
    %v419 = vadd.f32 %v273, %v387
    %v420 = vadd.f32 %v274, %v388
    %v421 = vadd.f32 %v275, %v389
    %v422 = vadd.f32 %v276, %v390
    %v423 = vadd.f32 %v277, %v391
    %v424 = vadd.f32 %v278, %v392
    %v425 = vadd.f32 %v279, %v393
    %v426 = vadd.f32 %v280, %v394
    %v427 = vadd.f32 %v281, %v395
    %v428 = vadd.f32 %v282, %v396
    %v429 = vadd.f32 %v283, %v397
    %v430 = vadd.f32 %v284, %v398
    %v431 = vadd.f32 %v285, %v399
    %v432 = vadd.f32 %v286, %v400
    %v433 = vadd.f32 %v287, %v401
    %v434 = vadd.f32 %v288, %v402
    %v435 = vadd.f32 %v289, %v403
    %v436 = vadd.f32 %v290, %v404
    %v437 = vadd.f32 %v291, %v405
    %v438 = vadd.f32 %v292, %v406
    %v439 = vadd.f32 %v293, %v407
    %v440 = vadd.f32 %v294, %v408
    %v441 = vadd.f32 %v295, %v409
    %v442 = vadd.f32 %v296, %v410
    %v443 = vadd.f32 %v297, %v411
    %v444 = vadd.f32 %v298, %v412
    %v445 = vadd.f32 %v299, %v413
    %v446 = vadd.f32 %v300, %v414
    %v447 = vadd.f32 %v301, %v415
    %v448 = vadd.f32 %v302, %v416
    %v449 = vadd.f32 %v303, %v417
    %v450 = vadd.f32 %v304, %v418
    %v451 = vtanh.pop %v419
    %v452 = vtanh.pop %v420
    %v453 = vtanh.pop %v421
    %v454 = vtanh.pop %v422
    %v455 = vtanh.pop %v423
    %v456 = vtanh.pop %v424
    %v457 = vtanh.pop %v425
    %v458 = vtanh.pop %v426
    %v459 = vtanh.pop %v427
    %v460 = vtanh.pop %v428
    %v461 = vtanh.pop %v429
    %v462 = vtanh.pop %v430
    %v463 = vtanh.pop %v431
    %v464 = vtanh.pop %v432
    %v465 = vtanh.pop %v433
    %v466 = vtanh.pop %v434
    %v467 = vtanh.pop %v435
    %v468 = vtanh.pop %v436
    %v469 = vtanh.pop %v437
    %v470 = vtanh.pop %v438
    %v471 = vtanh.pop %v439
    %v472 = vtanh.pop %v440
    %v473 = vtanh.pop %v441
    %v474 = vtanh.pop %v442
    %v475 = vtanh.pop %v443
    %v476 = vtanh.pop %v444
    %v477 = vtanh.pop %v445
    %v478 = vtanh.pop %v446
    %v479 = vtanh.pop %v447
    %v480 = vtanh.pop %v448
    %v481 = vtanh.pop %v449
    %v482 = vtanh.pop %v450
    %v483 = vld [vmem:[%s3] sm:$0xff]
    %v484 = vld [vmem:[%s3 + $0x8] sm:$0xff]
    %v485 = vld [vmem:[%s3 + $0x10] sm:$0xff]
    %v486 = vld [vmem:[%s3 + $0x18] sm:$0xff]
    %v487 = vld [vmem:[%s3 + $0x20] sm:$0xff]
    %v488 = vld [vmem:[%s3 + $0x28] sm:$0xff]
    %v489 = vld [vmem:[%s3 + $0x30] sm:$0xff]
    %v490 = vld [vmem:[%s3 + $0x38] sm:$0xff]
    %v491 = vld [vmem:[%s3 + $0x40] sm:$0xff]
    %v492 = vld [vmem:[%s3 + $0x48] sm:$0xff]
    %v493 = vld [vmem:[%s3 + $0x50] sm:$0xff]
    %v494 = vld [vmem:[%s3 + $0x58] sm:$0xff]
    %v495 = vld [vmem:[%s3 + $0x60] sm:$0xff]
    %v496 = vld [vmem:[%s3 + $0x68] sm:$0xff]
    %v497 = vld [vmem:[%s3 + $0x70] sm:$0xff]
    %v498 = vld [vmem:[%s3 + $0x78] sm:$0xff]
    %v499 = vld [vmem:[%s4] sm:$0xff]
    %v500 = vld [vmem:[%s4 + $0x8] sm:$0xff]
    %v501 = vld [vmem:[%s4 + $0x10] sm:$0xff]
    %v502 = vld [vmem:[%s4 + $0x18] sm:$0xff]
    %v503 = vld [vmem:[%s4 + $0x20] sm:$0xff]
    %v504 = vld [vmem:[%s4 + $0x28] sm:$0xff]
    %v505 = vld [vmem:[%s4 + $0x30] sm:$0xff]
    %v506 = vld [vmem:[%s4 + $0x38] sm:$0xff]
    %v507 = vld [vmem:[%s4 + $0x40] sm:$0xff]
    %v508 = vld [vmem:[%s4 + $0x48] sm:$0xff]
    %v509 = vld [vmem:[%s4 + $0x50] sm:$0xff]
    %v510 = vld [vmem:[%s4 + $0x58] sm:$0xff]
    %v511 = vld [vmem:[%s4 + $0x60] sm:$0xff]
    %v512 = vld [vmem:[%s4 + $0x68] sm:$0xff]
    %v513 = vld [vmem:[%s4 + $0x70] sm:$0xff]
    %v514 = vld [vmem:[%s4 + $0x78] sm:$0xff]
    %516 = vset.pattern.permute.xlu0 0
    %517 = vperm.xlu0 %516, %v499
    %v518 = vpop.permute.xlu0 %517
    %521 = vset.pattern.permute.xlu0 0
    %522 = vperm.xlu0 %521, %v500
    %v523 = vpop.permute.xlu0 %522
    %526 = vset.pattern.permute.xlu0 0
    %527 = vperm.xlu0 %526, %v501
    %v528 = vpop.permute.xlu0 %527
    %531 = vset.pattern.permute.xlu0 0
    %532 = vperm.xlu0 %531, %v502
    %v533 = vpop.permute.xlu0 %532
    %536 = vset.pattern.permute.xlu0 0
    %537 = vperm.xlu0 %536, %v503
    %v538 = vpop.permute.xlu0 %537
    %541 = vset.pattern.permute.xlu0 0
    %542 = vperm.xlu0 %541, %v504
    %v543 = vpop.permute.xlu0 %542
    %546 = vset.pattern.permute.xlu0 0
    %547 = vperm.xlu0 %546, %v505
    %v548 = vpop.permute.xlu0 %547
    %551 = vset.pattern.permute.xlu0 0
    %552 = vperm.xlu0 %551, %v506
    %v553 = vpop.permute.xlu0 %552
    %556 = vset.pattern.permute.xlu0 0
    %557 = vperm.xlu0 %556, %v507
    %v558 = vpop.permute.xlu0 %557
    %561 = vset.pattern.permute.xlu0 0
    %562 = vperm.xlu0 %561, %v508
    %v563 = vpop.permute.xlu0 %562
    %566 = vset.pattern.permute.xlu0 0
    %567 = vperm.xlu0 %566, %v509
    %v568 = vpop.permute.xlu0 %567
    %571 = vset.pattern.permute.xlu0 0
    %572 = vperm.xlu0 %571, %v510
    %v573 = vpop.permute.xlu0 %572
    %576 = vset.pattern.permute.xlu0 0
    %577 = vperm.xlu0 %576, %v511
    %v578 = vpop.permute.xlu0 %577
    %581 = vset.pattern.permute.xlu0 0
    %582 = vperm.xlu0 %581, %v512
    %v583 = vpop.permute.xlu0 %582
    %586 = vset.pattern.permute.xlu0 0
    %587 = vperm.xlu0 %586, %v513
    %v588 = vpop.permute.xlu0 %587
    %591 = vset.pattern.permute.xlu0 0
    %592 = vperm.xlu0 %591, %v514
    %v593 = vpop.permute.xlu0 %592
    %595 = vmatprep.subr.mxu0 %v452
    %596 = vmatpush1.msra.mxu0 %v451
    %597 = vmatprep.subr.mxu0 %v454
    %598 = vmatpush1.msra.mxu0 %v453
    %599 = vmatprep.subr.mxu0 %v456
    %600 = vmatpush1.msra.mxu0 %v455
    %601 = vmatprep.subr.mxu0 %v458
    %602 = vmatpush1.msra.mxu0 %v457
    %603 = vmatprep.subr.mxu0 %v460
    %604 = vmatpush1.msra.mxu0 %v459
    %605 = vmatprep.subr.mxu0 %v462
    %606 = vmatpush1.msra.mxu0 %v461
    %607 = vmatprep.subr.mxu0 %v464
    %608 = vmatpush1.msra.mxu0 %v463
    %609 = vmatprep.subr.mxu0 %v466
    %610 = vmatpush1.msra.mxu0 %v465
    %611 = vmatprep.subr.mxu0 %v468
    %612 = vmatpush1.msra.mxu0 %v467
    %613 = vmatprep.subr.mxu0 %v470
    %614 = vmatpush1.msra.mxu0 %v469
    %615 = vmatprep.subr.mxu0 %v472
    %616 = vmatpush1.msra.mxu0 %v471
    %617 = vmatprep.subr.mxu0 %v474
    %618 = vmatpush1.msra.mxu0 %v473
    %619 = vmatprep.subr.mxu0 %v476
    %620 = vmatpush1.msra.mxu0 %v475
    %621 = vmatprep.subr.mxu0 %v478
    %622 = vmatpush1.msra.mxu0 %v477
    %623 = vmatprep.subr.mxu0 %v480
    %624 = vmatpush1.msra.mxu0 %v479
    %625 = vmatprep.subr.mxu0 %v482
    %626 = vmatpush1.msra.mxu0 %v481
    %627 = vmatprep.subr.mxu0 0.0
    %628 = vmatpush1.msra.mxu0 0.0
    %629 = vmatprep.subr.mxu0 0.0
    %630 = vmatpush1.msra.mxu0 0.0
    %631 = vmatprep.subr.mxu0 0.0
    %632 = vmatpush1.msra.mxu0 0.0
    %633 = vmatprep.subr.mxu0 0.0
    %634 = vmatpush1.msra.mxu0 0.0
    %635 = vmatprep.subr.mxu0 0.0
    %636 = vmatpush1.msra.mxu0 0.0
    %637 = vmatprep.subr.mxu0 0.0
    %638 = vmatpush1.msra.mxu0 0.0
    %639 = vmatprep.subr.mxu0 0.0
    %640 = vmatpush1.msra.mxu0 0.0
    %641 = vmatprep.subr.mxu0 0.0
    %642 = vmatpush1.msra.mxu0 0.0
    %643 = vmatprep.subr.mxu0 0.0
    %644 = vmatpush1.msra.mxu0 0.0
    %645 = vmatprep.subr.mxu0 0.0
    %646 = vmatpush1.msra.mxu0 0.0
    %647 = vmatprep.subr.mxu0 0.0
    %648 = vmatpush1.msra.mxu0 0.0
    %649 = vmatprep.subr.mxu0 0.0
    %650 = vmatpush1.msra.mxu0 0.0
    %651 = vmatprep.subr.mxu0 0.0
    %652 = vmatpush1.msra.mxu0 0.0
    %653 = vmatprep.subr.mxu0 0.0
    %654 = vmatpush1.msra.mxu0 0.0
    %655 = vmatprep.subr.mxu0 0.0
    %656 = vmatpush1.msra.mxu0 0.0
    %657 = vmatprep.subr.mxu0 0.0
    %658 = vmatpush1.msra.mxu0 0.0
    %659 = vmatprep.mubr.f32.mxu0 0.0
    %660 = vmatmul.mubr.f32.gmra.mrb[0].mxu0 %v483
    %v661 = vpop.f32.mrb[0].mxu0
    %v662 = vadd.f32 %v518, %v661
    %v663 = vpop.f32.mrb[0].mxu0
    %v664 = vadd.f32 %v518, %v663
    %665 = vmatprep.mubr.f32.mxu0 0.0
    %666 = vmatmul.mubr.f32.gmra.mrb[0].mxu0 %v484
    %v667 = vpop.f32.mrb[0].mxu0
    %v668 = vadd.f32 %v523, %v667
    %v669 = vpop.f32.mrb[0].mxu0
    %v670 = vadd.f32 %v523, %v669
    %671 = vmatprep.mubr.f32.mxu0 0.0
    %672 = vmatmul.mubr.f32.gmra.mrb[0].mxu0 %v485
    %v673 = vpop.f32.mrb[0].mxu0
    %v674 = vadd.f32 %v528, %v673
    %v675 = vpop.f32.mrb[0].mxu0
    %v676 = vadd.f32 %v528, %v675
    %677 = vmatprep.mubr.f32.mxu0 0.0
    %678 = vmatmul.mubr.f32.gmra.mrb[0].mxu0 %v486
    %v679 = vpop.f32.mrb[0].mxu0
    %v680 = vadd.f32 %v533, %v679
    %v681 = vpop.f32.mrb[0].mxu0
    %v682 = vadd.f32 %v533, %v681
    %683 = vmatprep.mubr.f32.mxu0 0.0
    %684 = vmatmul.mubr.f32.gmra.mrb[0].mxu0 %v487
    %v685 = vpop.f32.mrb[0].mxu0
    %v686 = vadd.f32 %v538, %v685
    %v687 = vpop.f32.mrb[0].mxu0
    %v688 = vadd.f32 %v538, %v687
    %689 = vmatprep.mubr.f32.mxu0 0.0
    %690 = vmatmul.mubr.f32.gmra.mrb[0].mxu0 %v488
    %v691 = vpop.f32.mrb[0].mxu0
    %v692 = vadd.f32 %v543, %v691
    %v693 = vpop.f32.mrb[0].mxu0
    %v694 = vadd.f32 %v543, %v693
    %695 = vmatprep.mubr.f32.mxu0 0.0
    %696 = vmatmul.mubr.f32.gmra.mrb[0].mxu0 %v489
    %v697 = vpop.f32.mrb[0].mxu0
    %v698 = vadd.f32 %v548, %v697
    %v699 = vpop.f32.mrb[0].mxu0
    %v700 = vadd.f32 %v548, %v699
    %701 = vmatprep.mubr.f32.mxu0 0.0
    %702 = vmatmul.mubr.f32.gmra.mrb[0].mxu0 %v490
    %v703 = vpop.f32.mrb[0].mxu0
    %v704 = vadd.f32 %v553, %v703
    %v705 = vpop.f32.mrb[0].mxu0
    %v706 = vadd.f32 %v553, %v705
    %707 = vmatprep.mubr.f32.mxu0 0.0
    %708 = vmatmul.mubr.f32.gmra.mrb[0].mxu0 %v491
    %v709 = vpop.f32.mrb[0].mxu0
    %v710 = vadd.f32 %v558, %v709
    %v711 = vpop.f32.mrb[0].mxu0
    %v712 = vadd.f32 %v558, %v711
    %713 = vmatprep.mubr.f32.mxu0 0.0
    %714 = vmatmul.mubr.f32.gmra.mrb[0].mxu0 %v492
    %v715 = vpop.f32.mrb[0].mxu0
    %v716 = vadd.f32 %v563, %v715
    %v717 = vpop.f32.mrb[0].mxu0
    %v718 = vadd.f32 %v563, %v717
    %719 = vmatprep.mubr.f32.mxu0 0.0
    %720 = vmatmul.mubr.f32.gmra.mrb[0].mxu0 %v493
    %v721 = vpop.f32.mrb[0].mxu0
    %v722 = vadd.f32 %v568, %v721
    %v723 = vpop.f32.mrb[0].mxu0
    %v724 = vadd.f32 %v568, %v723
    %725 = vmatprep.mubr.f32.mxu0 0.0
    %726 = vmatmul.mubr.f32.gmra.mrb[0].mxu0 %v494
    %v727 = vpop.f32.mrb[0].mxu0
    %v728 = vadd.f32 %v573, %v727
    %v729 = vpop.f32.mrb[0].mxu0
    %v730 = vadd.f32 %v573, %v729
    %731 = vmatprep.mubr.f32.mxu0 0.0
    %732 = vmatmul.mubr.f32.gmra.mrb[0].mxu0 %v495
    %v733 = vpop.f32.mrb[0].mxu0
    %v734 = vadd.f32 %v578, %v733
    %v735 = vpop.f32.mrb[0].mxu0
    %v736 = vadd.f32 %v578, %v735
    %737 = vmatprep.mubr.f32.mxu0 0.0
    %738 = vmatmul.mubr.f32.gmra.mrb[0].mxu0 %v496
    %v739 = vpop.f32.mrb[0].mxu0
    %v740 = vadd.f32 %v583, %v739
    %v741 = vpop.f32.mrb[0].mxu0
    %v742 = vadd.f32 %v583, %v741
    %743 = vmatprep.mubr.f32.mxu0 0.0
    %744 = vmatmul.mubr.f32.gmra.mrb[0].mxu0 %v497
    %v745 = vpop.f32.mrb[0].mxu0
    %v746 = vadd.f32 %v588, %v745
    %v747 = vpop.f32.mrb[0].mxu0
    %v748 = vadd.f32 %v588, %v747
    %749 = vmatprep.mubr.f32.mxu0 0.0
    %750 = vmatmul.mubr.f32.gmra.mrb[0].mxu0 %v498
    %v751 = vpop.f32.mrb[0].mxu0
    %v752 = vadd.f32 %v593, %v751
    %v753 = vpop.f32.mrb[0].mxu0
    %v754 = vadd.f32 %v593, %v753
    %755 = vdwg.mxu0
    %v756 = vtanh.pop %v662
    %v757 = vtanh.pop %v664
    %v758 = vtanh.pop %v668
    %v759 = vtanh.pop %v670
    %v760 = vtanh.pop %v674
    %v761 = vtanh.pop %v676
    %v762 = vtanh.pop %v680
    %v763 = vtanh.pop %v682
    %v764 = vtanh.pop %v686
    %v765 = vtanh.pop %v688
    %v766 = vtanh.pop %v692
    %v767 = vtanh.pop %v694
    %v768 = vtanh.pop %v698
    %v769 = vtanh.pop %v700
    %v770 = vtanh.pop %v704
    %v771 = vtanh.pop %v706
    %v772 = vtanh.pop %v710
    %v773 = vtanh.pop %v712
    %v774 = vtanh.pop %v716
    %v775 = vtanh.pop %v718
    %v776 = vtanh.pop %v722
    %v777 = vtanh.pop %v724
    %v778 = vtanh.pop %v728
    %v779 = vtanh.pop %v730
    %v780 = vtanh.pop %v734
    %v781 = vtanh.pop %v736
    %v782 = vtanh.pop %v740
    %v783 = vtanh.pop %v742
    %v784 = vtanh.pop %v746
    %v785 = vtanh.pop %v748
    %v786 = vtanh.pop %v752
    %v787 = vtanh.pop %v754
    %v788 = vld [vmem:[%s5] sm:$0x1]
    %v789 = vld [vmem:[#allocation2] sm:$0x1]
    %791 = vset.pattern.permute.xlu0 0
    %792 = vperm.xlu0 %791, %v789
    %v793 = vpop.permute.xlu0 %792
    %v795 = vlaneseq
    %v796 = vshrl.u32 %v795, 7
    %v797 = vsub.s32 0, %v796
    %v798 = vrot.slane %v793, %v797
    %799 = vmatprep.subr.mxu0 %v757
    %800 = vmatpush1.msra.mxu0 %v756
    %801 = vmatprep.subr.mxu0 %v759
    %802 = vmatpush1.msra.mxu0 %v758
    %803 = vmatprep.subr.mxu0 %v761
    %804 = vmatpush1.msra.mxu0 %v760
    %805 = vmatprep.subr.mxu0 %v763
    %806 = vmatpush1.msra.mxu0 %v762
    %807 = vmatprep.subr.mxu0 %v765
    %808 = vmatpush1.msra.mxu0 %v764
    %809 = vmatprep.subr.mxu0 %v767
    %810 = vmatpush1.msra.mxu0 %v766
    %811 = vmatprep.subr.mxu0 %v769
    %812 = vmatpush1.msra.mxu0 %v768
    %813 = vmatprep.subr.mxu0 %v771
    %814 = vmatpush1.msra.mxu0 %v770
    %815 = vmatprep.subr.mxu0 %v773
    %816 = vmatpush1.msra.mxu0 %v772
    %817 = vmatprep.subr.mxu0 %v775
    %818 = vmatpush1.msra.mxu0 %v774
    %819 = vmatprep.subr.mxu0 %v777
    %820 = vmatpush1.msra.mxu0 %v776
    %821 = vmatprep.subr.mxu0 %v779
    %822 = vmatpush1.msra.mxu0 %v778
    %823 = vmatprep.subr.mxu0 %v781
    %824 = vmatpush1.msra.mxu0 %v780
    %825 = vmatprep.subr.mxu0 %v783
    %826 = vmatpush1.msra.mxu0 %v782
    %827 = vmatprep.subr.mxu0 %v785
    %828 = vmatpush1.msra.mxu0 %v784
    %829 = vmatprep.subr.mxu0 %v787
    %830 = vmatpush1.msra.mxu0 %v786
    %831 = vmatprep.subr.mxu0 0.0
    %832 = vmatpush1.msra.mxu0 0.0
    %833 = vmatprep.subr.mxu0 0.0
    %834 = vmatpush1.msra.mxu0 0.0
    %835 = vmatprep.subr.mxu0 0.0
    %836 = vmatpush1.msra.mxu0 0.0
    %837 = vmatprep.subr.mxu0 0.0
    %838 = vmatpush1.msra.mxu0 0.0
    %839 = vmatprep.subr.mxu0 0.0
    %840 = vmatpush1.msra.mxu0 0.0
    %841 = vmatprep.subr.mxu0 0.0
    %842 = vmatpush1.msra.mxu0 0.0
    %843 = vmatprep.subr.mxu0 0.0
    %844 = vmatpush1.msra.mxu0 0.0
    %845 = vmatprep.subr.mxu0 0.0
    %846 = vmatpush1.msra.mxu0 0.0
    %847 = vmatprep.subr.mxu0 0.0
    %848 = vmatpush1.msra.mxu0 0.0
    %849 = vmatprep.subr.mxu0 0.0
    %850 = vmatpush1.msra.mxu0 0.0
    %851 = vmatprep.subr.mxu0 0.0
    %852 = vmatpush1.msra.mxu0 0.0
    %853 = vmatprep.subr.mxu0 0.0
    %854 = vmatpush1.msra.mxu0 0.0
    %855 = vmatprep.subr.mxu0 0.0
    %856 = vmatpush1.msra.mxu0 0.0
    %857 = vmatprep.subr.mxu0 0.0
    %858 = vmatpush1.msra.mxu0 0.0
    %859 = vmatprep.subr.mxu0 0.0
    %860 = vmatpush1.msra.mxu0 0.0
    %861 = vmatprep.subr.mxu0 0.0
    %862 = vmatpush1.msra.mxu0 0.0
    %863 = vmatprep.mubr.f32.mxu0 0.0
    %864 = vmatmul.mubr.f32.gmra.mrb[0].mxu0 %v788
    %v865 = vpop.f32.mrb[0].mxu0
    %v866 = vadd.f32 %v798, %v865
    %v867 = vpop.f32.mrb[0].mxu0
    %v868 = vadd.f32 %v798, %v867
    %869 = vdwg.mxu0
    %v872 = vcombine.low %v866, %v868
    %v874 = vunpack.c.l.s4 1966171168
    %v875 = vunpack.c.0.s8 %v874
    %v876 = vlaneseq
    %v877 = vshrl.u32 %v876, 7
    %v878 = vsub.s32 %v875, %v877
    %v879 = vrot.slane %v872, %v878
    %v881 = vunpack.c.l.s4 1966171168
    %v882 = vunpack.c.0.s8 %v881
    %v883 = vlaneseq
    %v884 = vshrl.u32 %v883, 7
    %v885 = vsub.s32 %v882, %v884
    %v886 = vrot.slane %v879, %v885
    %v888 = vlaneseq
    %vm889 = vcmp.ge.s32.totalorder %v888, 0
    %vm890 = vcmp.lt.s32.totalorder %v888, 256
    %vm891 = vmand %vm889, %vm890
    %892 = vst.msk [vmem:[#allocation3] sm:$0x3] %vm891, %v886
    // Predicated region
    $region30: #{tpu_custom_call.1} parent=1 // pred_check
      _
    $region31: #{tpu_custom_call.1} parent=1 // pred_check_branch
      %894 = sbr.rel (0) target = $region33
    $region32: #{tpu_custom_call.1} parent=1 // pred_region
      %s896 = ssub.s32 32, 32
      %897 = vsyncadd [#allocation4], %s896
      %s899 = sshll.u32 [#allocation3], 4
      %s900 = int_to_ptr.vmem [resolvable:$true] %s899
      %902 = dma.vmem_to_hbm [thread:$0]  %s900, 32, %s7, [#allocation4]
    $region33: #{tpu_custom_call.1} parent=1 // pred_fallthru
      _
    // Predicated region
    $region34: #{tpu_custom_call.1} parent=1 // pred_check
      _
    $region35: #{tpu_custom_call.1} parent=1 // pred_check_branch
      %904 = sbr.rel (0) target = $region37
    $region36: #{tpu_custom_call.1} parent=1 // pred_region
      %905 = dma.done [#allocation4], 32
    $region37: #{tpu_custom_call.1} parent=1 // pred_fallthru
      _
    %906 = vsyncpa [#allocation4], 1

// kernel: tpu_custom_call.1
$region0: #{tpu_custom_call.1}
  #allocation0 [shape = 'u32[]', space=smem, size = 0x4, offset = 0x4, fixed_abs, tag = 'smem constant byte address 0x4 - core index']
  #allocation1 [shape = 'u32[144,128]{1,0:T(1,128)}', space=vmem, size = 0x12000, scoped, tag = 'internal scratch']
  #allocation2 [shape = 'f32[1,1]{1,0:T(1,128)S(1)}', space=vmem, size = 0x200, scoped, tag = 'scoped memory for tpu_custom_call.1']
  %s0 = inlined_call_operand.vmem [shape: f32[2,256], index: 0, kind: input, shape index: {}]
  %s1 = inlined_call_operand.vmem [shape: f32[128,2], index: 1, kind: input, shape index: {}]
  %s2 = inlined_call_operand.vmem [shape: f32[128,1], index: 2, kind: input, shape index: {}]
  %s3 = inlined_call_operand.vmem [shape: f32[128,128], index: 3, kind: input, shape index: {}]
  %s4 = inlined_call_operand.vmem [shape: f32[128,1], index: 4, kind: input, shape index: {}]
  %s5 = inlined_call_operand.vmem [shape: f32[1,128], index: 5, kind: input, shape index: {}]
  %s6 = inlined_call_operand.<no memory space> [shape: f32[1,1], index: 6, kind: input, shape index: {}]
  %s7 = inlined_call_operand.hbm [shape: f32[1,256], index: 7, kind: output, shape index: {}]
  %s8 = sld [smem:[#allocation0]]
  $region38: #{tpu_custom_call.1} parent=0
    _
  %s10 = ssub.s32 1, %s8
  %s11 = scalar_select 0, %s10, %s8
  %v12 = vstv %s6
  %13 = vst [vmem:[#allocation2] sm:$0x1] %v12
  $region1: #{tpu_custom_call.1} parent=0
    #allocation3 [shape = 'u8[1024]{0}', space=vmem, size = 0x400, scoped, tag = 'output window, operand 0, single buffered']
    #allocation4 [shape = 's32[1]{0}', space=sflag, size = 0x4, scoped, tag = 'scoped memory for tpu_custom_call.1']
    %14 = vsyncpa [#allocation4], 0
    // Predicated region
    $region2: #{tpu_custom_call.1} parent=1 // pred_check
      _
    $region3: #{tpu_custom_call.1} parent=1 // pred_check_branch
      %16 = sbr.rel (0) target = $region5
    $region4: #{tpu_custom_call.1} parent=1 // pred_region
      _
    $region5: #{tpu_custom_call.1} parent=1 // pred_fallthru
      _
    // Predicated region
    $region6: #{tpu_custom_call.1} parent=1 // pred_check
      _
    $region7: #{tpu_custom_call.1} parent=1 // pred_check_branch
      %18 = sbr.rel (0) target = $region9
    $region8: #{tpu_custom_call.1} parent=1 // pred_region
      _
    $region9: #{tpu_custom_call.1} parent=1 // pred_fallthru
      _
    // Predicated region
    $region10: #{tpu_custom_call.1} parent=1 // pred_check
      _
    $region11: #{tpu_custom_call.1} parent=1 // pred_check_branch
      %20 = sbr.rel (0) target = $region13
    $region12: #{tpu_custom_call.1} parent=1 // pred_region
      _
    $region13: #{tpu_custom_call.1} parent=1 // pred_fallthru
      _
    // Predicated region
    $region14: #{tpu_custom_call.1} parent=1 // pred_check
      _
    $region15: #{tpu_custom_call.1} parent=1 // pred_check_branch
      %22 = sbr.rel (0) target = $region17
    $region16: #{tpu_custom_call.1} parent=1 // pred_region
      _
    $region17: #{tpu_custom_call.1} parent=1 // pred_fallthru
      _
    // Predicated region
    $region18: #{tpu_custom_call.1} parent=1 // pred_check
      _
    $region19: #{tpu_custom_call.1} parent=1 // pred_check_branch
      %24 = sbr.rel (0) target = $region21
    $region20: #{tpu_custom_call.1} parent=1 // pred_region
      _
    $region21: #{tpu_custom_call.1} parent=1 // pred_fallthru
      _
    // Predicated region
    $region22: #{tpu_custom_call.1} parent=1 // pred_check
      _
    $region23: #{tpu_custom_call.1} parent=1 // pred_check_branch
      %26 = sbr.rel (0) target = $region25
    $region24: #{tpu_custom_call.1} parent=1 // pred_region
      _
    $region25: #{tpu_custom_call.1} parent=1 // pred_fallthru
      _
    // Predicated region
    $region26: #{tpu_custom_call.1} parent=1 // pred_check
      _
    $region27: #{tpu_custom_call.1} parent=1 // pred_check_branch
      %28 = sbr.rel (0) target = $region29
    $region28: #{tpu_custom_call.1} parent=1 // pred_region
      _
    $region29: #{tpu_custom_call.1} parent=1 // pred_fallthru
      _
    %v29 = vld [vmem:[%s0] sm:$0xf]
    %v30 = vld [vmem:[%s1] sm:$0xff]
    %v31 = vld [vmem:[%s1 + $0x8] sm:$0xff]
    %v32 = vld [vmem:[%s1 + $0x10] sm:$0xff]
    %v33 = vld [vmem:[%s1 + $0x18] sm:$0xff]
    %v34 = vld [vmem:[%s1 + $0x20] sm:$0xff]
    %v35 = vld [vmem:[%s1 + $0x28] sm:$0xff]
    %v36 = vld [vmem:[%s1 + $0x30] sm:$0xff]
    %v37 = vld [vmem:[%s1 + $0x38] sm:$0xff]
    %v38 = vld [vmem:[%s1 + $0x40] sm:$0xff]
    %v39 = vld [vmem:[%s1 + $0x48] sm:$0xff]
    %v40 = vld [vmem:[%s1 + $0x50] sm:$0xff]
    %v41 = vld [vmem:[%s1 + $0x58] sm:$0xff]
    %v42 = vld [vmem:[%s1 + $0x60] sm:$0xff]
    %v43 = vld [vmem:[%s1 + $0x68] sm:$0xff]
    %v44 = vld [vmem:[%s1 + $0x70] sm:$0xff]
    %v45 = vld [vmem:[%s1 + $0x78] sm:$0xff]
    %v46 = vld [vmem:[%s2] sm:$0xff]
    %v47 = vld [vmem:[%s2 + $0x8] sm:$0xff]
    %v48 = vld [vmem:[%s2 + $0x10] sm:$0xff]
    %v49 = vld [vmem:[%s2 + $0x18] sm:$0xff]
    %v50 = vld [vmem:[%s2 + $0x20] sm:$0xff]
    %v51 = vld [vmem:[%s2 + $0x28] sm:$0xff]
    %v52 = vld [vmem:[%s2 + $0x30] sm:$0xff]
    %v53 = vld [vmem:[%s2 + $0x38] sm:$0xff]
    %v54 = vld [vmem:[%s2 + $0x40] sm:$0xff]
    %v55 = vld [vmem:[%s2 + $0x48] sm:$0xff]
    %v56 = vld [vmem:[%s2 + $0x50] sm:$0xff]
    %v57 = vld [vmem:[%s2 + $0x58] sm:$0xff]
    %v58 = vld [vmem:[%s2 + $0x60] sm:$0xff]
    %v59 = vld [vmem:[%s2 + $0x68] sm:$0xff]
    %v60 = vld [vmem:[%s2 + $0x70] sm:$0xff]
    %v61 = vld [vmem:[%s2 + $0x78] sm:$0xff]
    %63 = vset.pattern.permute.xlu0 0
    %64 = vperm.xlu0 %63, %v30
    %v65 = vpop.permute.xlu0 %64
    %68 = vset.pattern.permute.xlu0 0
    %69 = vperm.xlu0 %68, %v31
    %v70 = vpop.permute.xlu0 %69
    %73 = vset.pattern.permute.xlu0 0
    %74 = vperm.xlu0 %73, %v32
    %v75 = vpop.permute.xlu0 %74
    %78 = vset.pattern.permute.xlu0 0
    %79 = vperm.xlu0 %78, %v33
    %v80 = vpop.permute.xlu0 %79
    %83 = vset.pattern.permute.xlu0 0
    %84 = vperm.xlu0 %83, %v34
    %v85 = vpop.permute.xlu0 %84
    %88 = vset.pattern.permute.xlu0 0
    %89 = vperm.xlu0 %88, %v35
    %v90 = vpop.permute.xlu0 %89
    %93 = vset.pattern.permute.xlu0 0
    %94 = vperm.xlu0 %93, %v36
    %v95 = vpop.permute.xlu0 %94
    %98 = vset.pattern.permute.xlu0 0
    %99 = vperm.xlu0 %98, %v37
    %v100 = vpop.permute.xlu0 %99
    %103 = vset.pattern.permute.xlu0 0
    %104 = vperm.xlu0 %103, %v38
    %v105 = vpop.permute.xlu0 %104
    %108 = vset.pattern.permute.xlu0 0
    %109 = vperm.xlu0 %108, %v39
    %v110 = vpop.permute.xlu0 %109
    %113 = vset.pattern.permute.xlu0 0
    %114 = vperm.xlu0 %113, %v40
    %v115 = vpop.permute.xlu0 %114
    %118 = vset.pattern.permute.xlu0 0
    %119 = vperm.xlu0 %118, %v41
    %v120 = vpop.permute.xlu0 %119
    %123 = vset.pattern.permute.xlu0 0
    %124 = vperm.xlu0 %123, %v42
    %v125 = vpop.permute.xlu0 %124
    %128 = vset.pattern.permute.xlu0 0
    %129 = vperm.xlu0 %128, %v43
    %v130 = vpop.permute.xlu0 %129
    %133 = vset.pattern.permute.xlu0 0
    %134 = vperm.xlu0 %133, %v44
    %v135 = vpop.permute.xlu0 %134
    %138 = vset.pattern.permute.xlu0 0
    %139 = vperm.xlu0 %138, %v45
    %v140 = vpop.permute.xlu0 %139
    %v143 = vlaneseq
    %v144 = vshrl.u32 %v143, 7
    %v145 = vsub.s32 0, %v144
    %v146 = vrot.slane %v29, %v145
    %v147 = vlaneseq
    %v148 = vshrl.u32 %v147, 7
    %v149 = vsub.s32 2, %v148
    %v150 = vrot.slane %v29, %v149
    %v153 = vlaneseq
    %v154 = vshrl.u32 %v153, 7
    %v155 = vsub.s32 0, %v154
    %v156 = vrot.slane %v146, %v155
    %v157 = vlaneseq
    %v158 = vshrl.u32 %v157, 7
    %v159 = vsub.s32 0, %v158
    %v160 = vrot.slane %v150, %v159
    %v161 = vmul.f32 %v65, %v156
    %v162 = vmul.f32 %v65, %v160
    %v163 = vmul.f32 %v70, %v156
    %v164 = vmul.f32 %v70, %v160
    %v165 = vmul.f32 %v75, %v156
    %v166 = vmul.f32 %v75, %v160
    %v167 = vmul.f32 %v80, %v156
    %v168 = vmul.f32 %v80, %v160
    %v169 = vmul.f32 %v85, %v156
    %v170 = vmul.f32 %v85, %v160
    %v171 = vmul.f32 %v90, %v156
    %v172 = vmul.f32 %v90, %v160
    %v173 = vmul.f32 %v95, %v156
    %v174 = vmul.f32 %v95, %v160
    %v175 = vmul.f32 %v100, %v156
    %v176 = vmul.f32 %v100, %v160
    %v177 = vmul.f32 %v105, %v156
    %v178 = vmul.f32 %v105, %v160
    %v179 = vmul.f32 %v110, %v156
    %v180 = vmul.f32 %v110, %v160
    %v181 = vmul.f32 %v115, %v156
    %v182 = vmul.f32 %v115, %v160
    %v183 = vmul.f32 %v120, %v156
    %v184 = vmul.f32 %v120, %v160
    %v185 = vmul.f32 %v125, %v156
    %v186 = vmul.f32 %v125, %v160
    %v187 = vmul.f32 %v130, %v156
    %v188 = vmul.f32 %v130, %v160
    %v189 = vmul.f32 %v135, %v156
    %v190 = vmul.f32 %v135, %v160
    %v191 = vmul.f32 %v140, %v156
    %v192 = vmul.f32 %v140, %v160
    %194 = vset.pattern.permute.xlu0 0
    %195 = vperm.xlu0 %194, %v46
    %v196 = vpop.permute.xlu0 %195
    %199 = vset.pattern.permute.xlu0 0
    %200 = vperm.xlu0 %199, %v47
    %v201 = vpop.permute.xlu0 %200
    %204 = vset.pattern.permute.xlu0 0
    %205 = vperm.xlu0 %204, %v48
    %v206 = vpop.permute.xlu0 %205
    %209 = vset.pattern.permute.xlu0 0
    %210 = vperm.xlu0 %209, %v49
    %v211 = vpop.permute.xlu0 %210
    %214 = vset.pattern.permute.xlu0 0
    %215 = vperm.xlu0 %214, %v50
    %v216 = vpop.permute.xlu0 %215
    %219 = vset.pattern.permute.xlu0 0
    %220 = vperm.xlu0 %219, %v51
    %v221 = vpop.permute.xlu0 %220
    %224 = vset.pattern.permute.xlu0 0
    %225 = vperm.xlu0 %224, %v52
    %v226 = vpop.permute.xlu0 %225
    %229 = vset.pattern.permute.xlu0 0
    %230 = vperm.xlu0 %229, %v53
    %v231 = vpop.permute.xlu0 %230
    %234 = vset.pattern.permute.xlu0 0
    %235 = vperm.xlu0 %234, %v54
    %v236 = vpop.permute.xlu0 %235
    %239 = vset.pattern.permute.xlu0 0
    %240 = vperm.xlu0 %239, %v55
    %v241 = vpop.permute.xlu0 %240
    %244 = vset.pattern.permute.xlu0 0
    %245 = vperm.xlu0 %244, %v56
    %v246 = vpop.permute.xlu0 %245
    %249 = vset.pattern.permute.xlu0 0
    %250 = vperm.xlu0 %249, %v57
    %v251 = vpop.permute.xlu0 %250
    %254 = vset.pattern.permute.xlu0 0
    %255 = vperm.xlu0 %254, %v58
    %v256 = vpop.permute.xlu0 %255
    %259 = vset.pattern.permute.xlu0 0
    %260 = vperm.xlu0 %259, %v59
    %v261 = vpop.permute.xlu0 %260
    %264 = vset.pattern.permute.xlu0 0
    %265 = vperm.xlu0 %264, %v60
    %v266 = vpop.permute.xlu0 %265
    %269 = vset.pattern.permute.xlu0 0
    %270 = vperm.xlu0 %269, %v61
    %v271 = vpop.permute.xlu0 %270
    %v273 = vadd.f32 %v196, %v161
    %v274 = vadd.f32 %v196, %v162
    %v275 = vadd.f32 %v201, %v163
    %v276 = vadd.f32 %v201, %v164
    %v277 = vadd.f32 %v206, %v165
    %v278 = vadd.f32 %v206, %v166
    %v279 = vadd.f32 %v211, %v167
    %v280 = vadd.f32 %v211, %v168
    %v281 = vadd.f32 %v216, %v169
    %v282 = vadd.f32 %v216, %v170
    %v283 = vadd.f32 %v221, %v171
    %v284 = vadd.f32 %v221, %v172
    %v285 = vadd.f32 %v226, %v173
    %v286 = vadd.f32 %v226, %v174
    %v287 = vadd.f32 %v231, %v175
    %v288 = vadd.f32 %v231, %v176
    %v289 = vadd.f32 %v236, %v177
    %v290 = vadd.f32 %v236, %v178
    %v291 = vadd.f32 %v241, %v179
    %v292 = vadd.f32 %v241, %v180
    %v293 = vadd.f32 %v246, %v181
    %v294 = vadd.f32 %v246, %v182
    %v295 = vadd.f32 %v251, %v183
    %v296 = vadd.f32 %v251, %v184
    %v297 = vadd.f32 %v256, %v185
    %v298 = vadd.f32 %v256, %v186
    %v299 = vadd.f32 %v261, %v187
    %v300 = vadd.f32 %v261, %v188
    %v301 = vadd.f32 %v266, %v189
    %v302 = vadd.f32 %v266, %v190
    %v303 = vadd.f32 %v271, %v191
    %v304 = vadd.f32 %v271, %v192
    %305 = vset.pattern.permute.xlu0 1
    %306 = vperm.xlu0 %305, %v30
    %v307 = vpop.permute.xlu0 %306
    %309 = vset.pattern.permute.xlu0 1
    %310 = vperm.xlu0 %309, %v31
    %v311 = vpop.permute.xlu0 %310
    %313 = vset.pattern.permute.xlu0 1
    %314 = vperm.xlu0 %313, %v32
    %v315 = vpop.permute.xlu0 %314
    %317 = vset.pattern.permute.xlu0 1
    %318 = vperm.xlu0 %317, %v33
    %v319 = vpop.permute.xlu0 %318
    %321 = vset.pattern.permute.xlu0 1
    %322 = vperm.xlu0 %321, %v34
    %v323 = vpop.permute.xlu0 %322
    %325 = vset.pattern.permute.xlu0 1
    %326 = vperm.xlu0 %325, %v35
    %v327 = vpop.permute.xlu0 %326
    %329 = vset.pattern.permute.xlu0 1
    %330 = vperm.xlu0 %329, %v36
    %v331 = vpop.permute.xlu0 %330
    %333 = vset.pattern.permute.xlu0 1
    %334 = vperm.xlu0 %333, %v37
    %v335 = vpop.permute.xlu0 %334
    %337 = vset.pattern.permute.xlu0 1
    %338 = vperm.xlu0 %337, %v38
    %v339 = vpop.permute.xlu0 %338
    %341 = vset.pattern.permute.xlu0 1
    %342 = vperm.xlu0 %341, %v39
    %v343 = vpop.permute.xlu0 %342
    %345 = vset.pattern.permute.xlu0 1
    %346 = vperm.xlu0 %345, %v40
    %v347 = vpop.permute.xlu0 %346
    %349 = vset.pattern.permute.xlu0 1
    %350 = vperm.xlu0 %349, %v41
    %v351 = vpop.permute.xlu0 %350
    %353 = vset.pattern.permute.xlu0 1
    %354 = vperm.xlu0 %353, %v42
    %v355 = vpop.permute.xlu0 %354
    %357 = vset.pattern.permute.xlu0 1
    %358 = vperm.xlu0 %357, %v43
    %v359 = vpop.permute.xlu0 %358
    %361 = vset.pattern.permute.xlu0 1
    %362 = vperm.xlu0 %361, %v44
    %v363 = vpop.permute.xlu0 %362
    %365 = vset.pattern.permute.xlu0 1
    %366 = vperm.xlu0 %365, %v45
    %v367 = vpop.permute.xlu0 %366
    %v369 = vlaneseq
    %v370 = vshrl.u32 %v369, 7
    %v371 = vsub.s32 1, %v370
    %v372 = vrot.slane %v29, %v371
    %v373 = vlaneseq
    %v374 = vshrl.u32 %v373, 7
    %v375 = vsub.s32 3, %v374
    %v376 = vrot.slane %v29, %v375
    %v379 = vlaneseq
    %v380 = vshrl.u32 %v379, 7
    %v381 = vsub.s32 1, %v380
    %v382 = vrot.slane %v372, %v381
    %v383 = vlaneseq
    %v384 = vshrl.u32 %v383, 7
    %v385 = vsub.s32 1, %v384
    %v386 = vrot.slane %v376, %v385
    %v387 = vmul.f32 %v307, %v382
    %v388 = vmul.f32 %v307, %v386
    %v389 = vmul.f32 %v311, %v382
    %v390 = vmul.f32 %v311, %v386
    %v391 = vmul.f32 %v315, %v382
    %v392 = vmul.f32 %v315, %v386
    %v393 = vmul.f32 %v319, %v382
    %v394 = vmul.f32 %v319, %v386
    %v395 = vmul.f32 %v323, %v382
    %v396 = vmul.f32 %v323, %v386
    %v397 = vmul.f32 %v327, %v382
    %v398 = vmul.f32 %v327, %v386
    %v399 = vmul.f32 %v331, %v382
    %v400 = vmul.f32 %v331, %v386
    %v401 = vmul.f32 %v335, %v382
    %v402 = vmul.f32 %v335, %v386
    %v403 = vmul.f32 %v339, %v382
    %v404 = vmul.f32 %v339, %v386
    %v405 = vmul.f32 %v343, %v382
    %v406 = vmul.f32 %v343, %v386
    %v407 = vmul.f32 %v347, %v382
    %v408 = vmul.f32 %v347, %v386
    %v409 = vmul.f32 %v351, %v382
    %v410 = vmul.f32 %v351, %v386
    %v411 = vmul.f32 %v355, %v382
    %v412 = vmul.f32 %v355, %v386
    %v413 = vmul.f32 %v359, %v382
    %v414 = vmul.f32 %v359, %v386
    %v415 = vmul.f32 %v363, %v382
    %v416 = vmul.f32 %v363, %v386
    %v417 = vmul.f32 %v367, %v382
    %v418 = vmul.f32 %v367, %v386
    %v419 = vadd.f32 %v273, %v387
    %v420 = vadd.f32 %v274, %v388
    %v421 = vadd.f32 %v275, %v389
    %v422 = vadd.f32 %v276, %v390
    %v423 = vadd.f32 %v277, %v391
    %v424 = vadd.f32 %v278, %v392
    %v425 = vadd.f32 %v279, %v393
    %v426 = vadd.f32 %v280, %v394
    %v427 = vadd.f32 %v281, %v395
    %v428 = vadd.f32 %v282, %v396
    %v429 = vadd.f32 %v283, %v397
    %v430 = vadd.f32 %v284, %v398
    %v431 = vadd.f32 %v285, %v399
    %v432 = vadd.f32 %v286, %v400
    %v433 = vadd.f32 %v287, %v401
    %v434 = vadd.f32 %v288, %v402
    %v435 = vadd.f32 %v289, %v403
    %v436 = vadd.f32 %v290, %v404
    %v437 = vadd.f32 %v291, %v405
    %v438 = vadd.f32 %v292, %v406
    %v439 = vadd.f32 %v293, %v407
    %v440 = vadd.f32 %v294, %v408
    %v441 = vadd.f32 %v295, %v409
    %v442 = vadd.f32 %v296, %v410
    %v443 = vadd.f32 %v297, %v411
    %v444 = vadd.f32 %v298, %v412
    %v445 = vadd.f32 %v299, %v413
    %v446 = vadd.f32 %v300, %v414
    %v447 = vadd.f32 %v301, %v415
    %v448 = vadd.f32 %v302, %v416
    %v449 = vadd.f32 %v303, %v417
    %v450 = vadd.f32 %v304, %v418
    %v451 = vtanh.pop %v419
    %v452 = vtanh.pop %v420
    %v453 = vtanh.pop %v421
    %v454 = vtanh.pop %v422
    %v455 = vtanh.pop %v423
    %v456 = vtanh.pop %v424
    %v457 = vtanh.pop %v425
    %v458 = vtanh.pop %v426
    %v459 = vtanh.pop %v427
    %v460 = vtanh.pop %v428
    %v461 = vtanh.pop %v429
    %v462 = vtanh.pop %v430
    %v463 = vtanh.pop %v431
    %v464 = vtanh.pop %v432
    %v465 = vtanh.pop %v433
    %v466 = vtanh.pop %v434
    %v467 = vtanh.pop %v435
    %v468 = vtanh.pop %v436
    %v469 = vtanh.pop %v437
    %v470 = vtanh.pop %v438
    %v471 = vtanh.pop %v439
    %v472 = vtanh.pop %v440
    %v473 = vtanh.pop %v441
    %v474 = vtanh.pop %v442
    %v475 = vtanh.pop %v443
    %v476 = vtanh.pop %v444
    %v477 = vtanh.pop %v445
    %v478 = vtanh.pop %v446
    %v479 = vtanh.pop %v447
    %v480 = vtanh.pop %v448
    %v481 = vtanh.pop %v449
    %v482 = vtanh.pop %v450
    %v483 = vld [vmem:[%s3] sm:$0xff]
    %v484 = vld [vmem:[%s3 + $0x8] sm:$0xff]
    %v485 = vld [vmem:[%s3 + $0x10] sm:$0xff]
    %v486 = vld [vmem:[%s3 + $0x18] sm:$0xff]
    %v487 = vld [vmem:[%s3 + $0x20] sm:$0xff]
    %v488 = vld [vmem:[%s3 + $0x28] sm:$0xff]
    %v489 = vld [vmem:[%s3 + $0x30] sm:$0xff]
    %v490 = vld [vmem:[%s3 + $0x38] sm:$0xff]
    %v491 = vld [vmem:[%s3 + $0x40] sm:$0xff]
    %v492 = vld [vmem:[%s3 + $0x48] sm:$0xff]
    %v493 = vld [vmem:[%s3 + $0x50] sm:$0xff]
    %v494 = vld [vmem:[%s3 + $0x58] sm:$0xff]
    %v495 = vld [vmem:[%s3 + $0x60] sm:$0xff]
    %v496 = vld [vmem:[%s3 + $0x68] sm:$0xff]
    %v497 = vld [vmem:[%s3 + $0x70] sm:$0xff]
    %v498 = vld [vmem:[%s3 + $0x78] sm:$0xff]
    %v499 = vld [vmem:[%s4] sm:$0xff]
    %v500 = vld [vmem:[%s4 + $0x8] sm:$0xff]
    %v501 = vld [vmem:[%s4 + $0x10] sm:$0xff]
    %v502 = vld [vmem:[%s4 + $0x18] sm:$0xff]
    %v503 = vld [vmem:[%s4 + $0x20] sm:$0xff]
    %v504 = vld [vmem:[%s4 + $0x28] sm:$0xff]
    %v505 = vld [vmem:[%s4 + $0x30] sm:$0xff]
    %v506 = vld [vmem:[%s4 + $0x38] sm:$0xff]
    %v507 = vld [vmem:[%s4 + $0x40] sm:$0xff]
    %v508 = vld [vmem:[%s4 + $0x48] sm:$0xff]
    %v509 = vld [vmem:[%s4 + $0x50] sm:$0xff]
    %v510 = vld [vmem:[%s4 + $0x58] sm:$0xff]
    %v511 = vld [vmem:[%s4 + $0x60] sm:$0xff]
    %v512 = vld [vmem:[%s4 + $0x68] sm:$0xff]
    %v513 = vld [vmem:[%s4 + $0x70] sm:$0xff]
    %v514 = vld [vmem:[%s4 + $0x78] sm:$0xff]
    %516 = vset.pattern.permute.xlu0 0
    %517 = vperm.xlu0 %516, %v499
    %v518 = vpop.permute.xlu0 %517
    %521 = vset.pattern.permute.xlu0 0
    %522 = vperm.xlu0 %521, %v500
    %v523 = vpop.permute.xlu0 %522
    %526 = vset.pattern.permute.xlu0 0
    %527 = vperm.xlu0 %526, %v501
    %v528 = vpop.permute.xlu0 %527
    %531 = vset.pattern.permute.xlu0 0
    %532 = vperm.xlu0 %531, %v502
    %v533 = vpop.permute.xlu0 %532
    %536 = vset.pattern.permute.xlu0 0
    %537 = vperm.xlu0 %536, %v503
    %v538 = vpop.permute.xlu0 %537
    %541 = vset.pattern.permute.xlu0 0
    %542 = vperm.xlu0 %541, %v504
    %v543 = vpop.permute.xlu0 %542
    %546 = vset.pattern.permute.xlu0 0
    %547 = vperm.xlu0 %546, %v505
    %v548 = vpop.permute.xlu0 %547
    %551 = vset.pattern.permute.xlu0 0
    %552 = vperm.xlu0 %551, %v506
    %v553 = vpop.permute.xlu0 %552
    %556 = vset.pattern.permute.xlu0 0
    %557 = vperm.xlu0 %556, %v507
    %v558 = vpop.permute.xlu0 %557
    %561 = vset.pattern.permute.xlu0 0
    %562 = vperm.xlu0 %561, %v508
    %v563 = vpop.permute.xlu0 %562
    %566 = vset.pattern.permute.xlu0 0
    %567 = vperm.xlu0 %566, %v509
    %v568 = vpop.permute.xlu0 %567
    %571 = vset.pattern.permute.xlu0 0
    %572 = vperm.xlu0 %571, %v510
    %v573 = vpop.permute.xlu0 %572
    %576 = vset.pattern.permute.xlu0 0
    %577 = vperm.xlu0 %576, %v511
    %v578 = vpop.permute.xlu0 %577
    %581 = vset.pattern.permute.xlu0 0
    %582 = vperm.xlu0 %581, %v512
    %v583 = vpop.permute.xlu0 %582
    %586 = vset.pattern.permute.xlu0 0
    %587 = vperm.xlu0 %586, %v513
    %v588 = vpop.permute.xlu0 %587
    %591 = vset.pattern.permute.xlu0 0
    %592 = vperm.xlu0 %591, %v514
    %v593 = vpop.permute.xlu0 %592
    %595 = vmatprep.subr.mxu0 %v452
    %596 = vmatpush1.msra.mxu0 %v451
    %597 = vmatprep.subr.mxu0 %v454
    %598 = vmatpush1.msra.mxu0 %v453
    %599 = vmatprep.subr.mxu0 %v456
    %600 = vmatpush1.msra.mxu0 %v455
    %601 = vmatprep.subr.mxu0 %v458
    %602 = vmatpush1.msra.mxu0 %v457
    %603 = vmatprep.subr.mxu0 %v460
    %604 = vmatpush1.msra.mxu0 %v459
    %605 = vmatprep.subr.mxu0 %v462
    %606 = vmatpush1.msra.mxu0 %v461
    %607 = vmatprep.subr.mxu0 %v464
    %608 = vmatpush1.msra.mxu0 %v463
    %609 = vmatprep.subr.mxu0 %v466
    %610 = vmatpush1.msra.mxu0 %v465
    %611 = vmatprep.subr.mxu0 %v468
    %612 = vmatpush1.msra.mxu0 %v467
    %613 = vmatprep.subr.mxu0 %v470
    %614 = vmatpush1.msra.mxu0 %v469
    %615 = vmatprep.subr.mxu0 %v472
    %616 = vmatpush1.msra.mxu0 %v471
    %617 = vmatprep.subr.mxu0 %v474
    %618 = vmatpush1.msra.mxu0 %v473
    %619 = vmatprep.subr.mxu0 %v476
    %620 = vmatpush1.msra.mxu0 %v475
    %621 = vmatprep.subr.mxu0 %v478
    %622 = vmatpush1.msra.mxu0 %v477
    %623 = vmatprep.subr.mxu0 %v480
    %624 = vmatpush1.msra.mxu0 %v479
    %625 = vmatprep.subr.mxu0 %v482
    %626 = vmatpush1.msra.mxu0 %v481
    %627 = vmatprep.subr.mxu0 0.0
    %628 = vmatpush1.msra.mxu0 0.0
    %629 = vmatprep.subr.mxu0 0.0
    %630 = vmatpush1.msra.mxu0 0.0
    %631 = vmatprep.subr.mxu0 0.0
    %632 = vmatpush1.msra.mxu0 0.0
    %633 = vmatprep.subr.mxu0 0.0
    %634 = vmatpush1.msra.mxu0 0.0
    %635 = vmatprep.subr.mxu0 0.0
    %636 = vmatpush1.msra.mxu0 0.0
    %637 = vmatprep.subr.mxu0 0.0
    %638 = vmatpush1.msra.mxu0 0.0
    %639 = vmatprep.subr.mxu0 0.0
    %640 = vmatpush1.msra.mxu0 0.0
    %641 = vmatprep.subr.mxu0 0.0
    %642 = vmatpush1.msra.mxu0 0.0
    %643 = vmatprep.subr.mxu0 0.0
    %644 = vmatpush1.msra.mxu0 0.0
    %645 = vmatprep.subr.mxu0 0.0
    %646 = vmatpush1.msra.mxu0 0.0
    %647 = vmatprep.subr.mxu0 0.0
    %648 = vmatpush1.msra.mxu0 0.0
    %649 = vmatprep.subr.mxu0 0.0
    %650 = vmatpush1.msra.mxu0 0.0
    %651 = vmatprep.subr.mxu0 0.0
    %652 = vmatpush1.msra.mxu0 0.0
    %653 = vmatprep.subr.mxu0 0.0
    %654 = vmatpush1.msra.mxu0 0.0
    %655 = vmatprep.subr.mxu0 0.0
    %656 = vmatpush1.msra.mxu0 0.0
    %657 = vmatprep.subr.mxu0 0.0
    %658 = vmatpush1.msra.mxu0 0.0
    %659 = vmatprep.mubr.f32.mxu0 0.0
    %660 = vmatmul.mubr.f32.gmra.mrb[0].mxu0 %v483
    %v661 = vpop.f32.mrb[0].mxu0
    %v662 = vadd.f32 %v518, %v661
    %v663 = vpop.f32.mrb[0].mxu0
    %v664 = vadd.f32 %v518, %v663
    %665 = vmatprep.mubr.f32.mxu0 0.0
    %666 = vmatmul.mubr.f32.gmra.mrb[0].mxu0 %v484
    %v667 = vpop.f32.mrb[0].mxu0
    %v668 = vadd.f32 %v523, %v667
    %v669 = vpop.f32.mrb[0].mxu0
    %v670 = vadd.f32 %v523, %v669
    %671 = vmatprep.mubr.f32.mxu0 0.0
    %672 = vmatmul.mubr.f32.gmra.mrb[0].mxu0 %v485
    %v673 = vpop.f32.mrb[0].mxu0
    %v674 = vadd.f32 %v528, %v673
    %v675 = vpop.f32.mrb[0].mxu0
    %v676 = vadd.f32 %v528, %v675
    %677 = vmatprep.mubr.f32.mxu0 0.0
    %678 = vmatmul.mubr.f32.gmra.mrb[0].mxu0 %v486
    %v679 = vpop.f32.mrb[0].mxu0
    %v680 = vadd.f32 %v533, %v679
    %v681 = vpop.f32.mrb[0].mxu0
    %v682 = vadd.f32 %v533, %v681
    %683 = vmatprep.mubr.f32.mxu0 0.0
    %684 = vmatmul.mubr.f32.gmra.mrb[0].mxu0 %v487
    %v685 = vpop.f32.mrb[0].mxu0
    %v686 = vadd.f32 %v538, %v685
    %v687 = vpop.f32.mrb[0].mxu0
    %v688 = vadd.f32 %v538, %v687
    %689 = vmatprep.mubr.f32.mxu0 0.0
    %690 = vmatmul.mubr.f32.gmra.mrb[0].mxu0 %v488
    %v691 = vpop.f32.mrb[0].mxu0
    %v692 = vadd.f32 %v543, %v691
    %v693 = vpop.f32.mrb[0].mxu0
    %v694 = vadd.f32 %v543, %v693
    %695 = vmatprep.mubr.f32.mxu0 0.0
    %696 = vmatmul.mubr.f32.gmra.mrb[0].mxu0 %v489
    %v697 = vpop.f32.mrb[0].mxu0
    %v698 = vadd.f32 %v548, %v697
    %v699 = vpop.f32.mrb[0].mxu0
    %v700 = vadd.f32 %v548, %v699
    %701 = vmatprep.mubr.f32.mxu0 0.0
    %702 = vmatmul.mubr.f32.gmra.mrb[0].mxu0 %v490
    %v703 = vpop.f32.mrb[0].mxu0
    %v704 = vadd.f32 %v553, %v703
    %v705 = vpop.f32.mrb[0].mxu0
    %v706 = vadd.f32 %v553, %v705
    %707 = vmatprep.mubr.f32.mxu0 0.0
    %708 = vmatmul.mubr.f32.gmra.mrb[0].mxu0 %v491
    %v709 = vpop.f32.mrb[0].mxu0
    %v710 = vadd.f32 %v558, %v709
    %v711 = vpop.f32.mrb[0].mxu0
    %v712 = vadd.f32 %v558, %v711
    %713 = vmatprep.mubr.f32.mxu0 0.0
    %714 = vmatmul.mubr.f32.gmra.mrb[0].mxu0 %v492
    %v715 = vpop.f32.mrb[0].mxu0
    %v716 = vadd.f32 %v563, %v715
    %v717 = vpop.f32.mrb[0].mxu0
    %v718 = vadd.f32 %v563, %v717
    %719 = vmatprep.mubr.f32.mxu0 0.0
    %720 = vmatmul.mubr.f32.gmra.mrb[0].mxu0 %v493
    %v721 = vpop.f32.mrb[0].mxu0
    %v722 = vadd.f32 %v568, %v721
    %v723 = vpop.f32.mrb[0].mxu0
    %v724 = vadd.f32 %v568, %v723
    %725 = vmatprep.mubr.f32.mxu0 0.0
    %726 = vmatmul.mubr.f32.gmra.mrb[0].mxu0 %v494
    %v727 = vpop.f32.mrb[0].mxu0
    %v728 = vadd.f32 %v573, %v727
    %v729 = vpop.f32.mrb[0].mxu0
    %v730 = vadd.f32 %v573, %v729
    %731 = vmatprep.mubr.f32.mxu0 0.0
    %732 = vmatmul.mubr.f32.gmra.mrb[0].mxu0 %v495
    %v733 = vpop.f32.mrb[0].mxu0
    %v734 = vadd.f32 %v578, %v733
    %v735 = vpop.f32.mrb[0].mxu0
    %v736 = vadd.f32 %v578, %v735
    %737 = vmatprep.mubr.f32.mxu0 0.0
    %738 = vmatmul.mubr.f32.gmra.mrb[0].mxu0 %v496
    %v739 = vpop.f32.mrb[0].mxu0
    %v740 = vadd.f32 %v583, %v739
    %v741 = vpop.f32.mrb[0].mxu0
    %v742 = vadd.f32 %v583, %v741
    %743 = vmatprep.mubr.f32.mxu0 0.0
    %744 = vmatmul.mubr.f32.gmra.mrb[0].mxu0 %v497
    %v745 = vpop.f32.mrb[0].mxu0
    %v746 = vadd.f32 %v588, %v745
    %v747 = vpop.f32.mrb[0].mxu0
    %v748 = vadd.f32 %v588, %v747
    %749 = vmatprep.mubr.f32.mxu0 0.0
    %750 = vmatmul.mubr.f32.gmra.mrb[0].mxu0 %v498
    %v751 = vpop.f32.mrb[0].mxu0
    %v752 = vadd.f32 %v593, %v751
    %v753 = vpop.f32.mrb[0].mxu0
    %v754 = vadd.f32 %v593, %v753
    %755 = vdwg.mxu0
    %v756 = vtanh.pop %v662
    %v757 = vtanh.pop %v664
    %v758 = vtanh.pop %v668
    %v759 = vtanh.pop %v670
    %v760 = vtanh.pop %v674
    %v761 = vtanh.pop %v676
    %v762 = vtanh.pop %v680
    %v763 = vtanh.pop %v682
    %v764 = vtanh.pop %v686
    %v765 = vtanh.pop %v688
    %v766 = vtanh.pop %v692
    %v767 = vtanh.pop %v694
    %v768 = vtanh.pop %v698
    %v769 = vtanh.pop %v700
    %v770 = vtanh.pop %v704
    %v771 = vtanh.pop %v706
    %v772 = vtanh.pop %v710
    %v773 = vtanh.pop %v712
    %v774 = vtanh.pop %v716
    %v775 = vtanh.pop %v718
    %v776 = vtanh.pop %v722
    %v777 = vtanh.pop %v724
    %v778 = vtanh.pop %v728
    %v779 = vtanh.pop %v730
    %v780 = vtanh.pop %v734
    %v781 = vtanh.pop %v736
    %v782 = vtanh.pop %v740
    %v783 = vtanh.pop %v742
    %v784 = vtanh.pop %v746
    %v785 = vtanh.pop %v748
    %v786 = vtanh.pop %v752
    %v787 = vtanh.pop %v754
    %v788 = vld [vmem:[%s5] sm:$0x1]
    %v789 = vld [vmem:[#allocation2] sm:$0x1]
    %791 = vset.pattern.permute.xlu0 0
    %792 = vperm.xlu0 %791, %v789
    %v793 = vpop.permute.xlu0 %792
    %v795 = vlaneseq
    %v796 = vshrl.u32 %v795, 7
    %v797 = vsub.s32 0, %v796
    %v798 = vrot.slane %v793, %v797
    %799 = vmatprep.subr.mxu0 %v757
    %800 = vmatpush1.msra.mxu0 %v756
    %801 = vmatprep.subr.mxu0 %v759
    %802 = vmatpush1.msra.mxu0 %v758
    %803 = vmatprep.subr.mxu0 %v761
    %804 = vmatpush1.msra.mxu0 %v760
    %805 = vmatprep.subr.mxu0 %v763
    %806 = vmatpush1.msra.mxu0 %v762
    %807 = vmatprep.subr.mxu0 %v765
    %808 = vmatpush1.msra.mxu0 %v764
    %809 = vmatprep.subr.mxu0 %v767
    %810 = vmatpush1.msra.mxu0 %v766
    %811 = vmatprep.subr.mxu0 %v769
    %812 = vmatpush1.msra.mxu0 %v768
    %813 = vmatprep.subr.mxu0 %v771
    %814 = vmatpush1.msra.mxu0 %v770
    %815 = vmatprep.subr.mxu0 %v773
    %816 = vmatpush1.msra.mxu0 %v772
    %817 = vmatprep.subr.mxu0 %v775
    %818 = vmatpush1.msra.mxu0 %v774
    %819 = vmatprep.subr.mxu0 %v777
    %820 = vmatpush1.msra.mxu0 %v776
    %821 = vmatprep.subr.mxu0 %v779
    %822 = vmatpush1.msra.mxu0 %v778
    %823 = vmatprep.subr.mxu0 %v781
    %824 = vmatpush1.msra.mxu0 %v780
    %825 = vmatprep.subr.mxu0 %v783
    %826 = vmatpush1.msra.mxu0 %v782
    %827 = vmatprep.subr.mxu0 %v785
    %828 = vmatpush1.msra.mxu0 %v784
    %829 = vmatprep.subr.mxu0 %v787
    %830 = vmatpush1.msra.mxu0 %v786
    %831 = vmatprep.subr.mxu0 0.0
    %832 = vmatpush1.msra.mxu0 0.0
    %833 = vmatprep.subr.mxu0 0.0
    %834 = vmatpush1.msra.mxu0 0.0
    %835 = vmatprep.subr.mxu0 0.0
    %836 = vmatpush1.msra.mxu0 0.0
    %837 = vmatprep.subr.mxu0 0.0
    %838 = vmatpush1.msra.mxu0 0.0
    %839 = vmatprep.subr.mxu0 0.0
    %840 = vmatpush1.msra.mxu0 0.0
    %841 = vmatprep.subr.mxu0 0.0
    %842 = vmatpush1.msra.mxu0 0.0
    %843 = vmatprep.subr.mxu0 0.0
    %844 = vmatpush1.msra.mxu0 0.0
    %845 = vmatprep.subr.mxu0 0.0
    %846 = vmatpush1.msra.mxu0 0.0
    %847 = vmatprep.subr.mxu0 0.0
    %848 = vmatpush1.msra.mxu0 0.0
    %849 = vmatprep.subr.mxu0 0.0
    %850 = vmatpush1.msra.mxu0 0.0
    %851 = vmatprep.subr.mxu0 0.0
    %852 = vmatpush1.msra.mxu0 0.0
    %853 = vmatprep.subr.mxu0 0.0
    %854 = vmatpush1.msra.mxu0 0.0
    %855 = vmatprep.subr.mxu0 0.0
    %856 = vmatpush1.msra.mxu0 0.0
    %857 = vmatprep.subr.mxu0 0.0
    %858 = vmatpush1.msra.mxu0 0.0
    %859 = vmatprep.subr.mxu0 0.0
    %860 = vmatpush1.msra.mxu0 0.0
    %861 = vmatprep.subr.mxu0 0.0
    %862 = vmatpush1.msra.mxu0 0.0
    %863 = vmatprep.mubr.f32.mxu0 0.0
    %864 = vmatmul.mubr.f32.gmra.mrb[0].mxu0 %v788
    %v865 = vpop.f32.mrb[0].mxu0
    %v866 = vadd.f32 %v798, %v865
    %v867 = vpop.f32.mrb[0].mxu0
    %v868 = vadd.f32 %v798, %v867
    %869 = vdwg.mxu0
    %v872 = vcombine.low %v866, %v868
    %v874 = vunpack.c.l.s4 1966171168
    %v875 = vunpack.c.0.s8 %v874
    %v876 = vlaneseq
    %v877 = vshrl.u32 %v876, 7
    %v878 = vsub.s32 %v875, %v877
    %v879 = vrot.slane %v872, %v878
    %v881 = vunpack.c.l.s4 1966171168
    %v882 = vunpack.c.0.s8 %v881
    %v883 = vlaneseq
    %v884 = vshrl.u32 %v883, 7
    %v885 = vsub.s32 %v882, %v884
    %v886 = vrot.slane %v879, %v885
    %v888 = vlaneseq
    %vm889 = vcmp.ge.s32.totalorder %v888, 0
    %vm890 = vcmp.lt.s32.totalorder %v888, 256
    %vm891 = vmand %vm889, %vm890
    %892 = vst.msk [vmem:[#allocation3] sm:$0x3] %vm891, %v886
    // Predicated region
    $region30: #{tpu_custom_call.1} parent=1 // pred_check
      _
    $region31: #{tpu_custom_call.1} parent=1 // pred_check_branch
      %894 = sbr.rel (0) target = $region33
    $region32: #{tpu_custom_call.1} parent=1 // pred_region
      %s896 = ssub.s32 32, 32
      %897 = vsyncadd [#allocation4], %s896
      %s899 = sshll.u32 [#allocation3], 4
      %s900 = int_to_ptr.vmem [resolvable:$true] %s899
      %902 = dma.vmem_to_hbm [thread:$0]  %s900, 32, %s7, [#allocation4]
    $region33: #{tpu_custom_call.1} parent=1 // pred_fallthru
      _
    // Predicated region
    $region34: #{tpu_custom_call.1} parent=1 // pred_check
      _
    $region35: #{tpu_custom_call.1} parent=1 // pred_check_branch
      %904 = sbr.rel (0) target = $region37
    $region36: #{tpu_custom_call.1} parent=1 // pred_region
      %905 = dma.done [#allocation4], 32
    $region37: #{tpu_custom_call.1} parent=1 // pred_fallthru
      _
    %906 = vsyncpa [#allocation4], 1

</llo_original>
